<compile_context>
chip_gen: v5e
topology: v5e:2x2
jax: 0.10.0
libtpu: 0.0.40
codegen_flags: <defaults>
</compile_context>

<pallas_src>
import functools

import jax
import jax.numpy as jnp
from jax import lax
from jax.experimental import pallas as pl
from jax.experimental.pallas import tpu as pltpu

_LANE = 128
_VMEM_LIMIT = 32 * 1024 * 1024   # explicit scoped-VMEM limit (v5e default is only 16 MiB)


def _round_up(x, m):
    return (x + m - 1) // m * m


def _pad_to(a, shape):
    return jnp.pad(a, [(0, s - d) for d, s in zip(a.shape, shape)])


# ----------------------------------------------------------------------------
# kernel A : conv1 (1x1) + BN1 + ReLU   (M-gridded, bf16 out, lane-dense C)
# ----------------------------------------------------------------------------
def _conv1x1_bn_relu_kernel(x_ref, w_ref, s_ref, b_ref, o_ref):
    y = jnp.dot(x_ref[...], w_ref[...], preferred_element_type=jnp.float32)
    y = y * s_ref[...] + b_ref[...]
    o_ref[...] = jnp.maximum(y, 0.0).astype(o_ref.dtype)


def _conv1x1_bn_relu(x_flat, w, scale, bias, *, block_m=512):
    """x_flat: [M, K] bf16, w: [K, C] bf16, scale/bias: [1, C] f32 -> [M, C] bf16."""
    M, K = x_flat.shape
    C = w.shape[1]
    # At least 2 row blocks when possible (megacore), rows a multiple of 8 (sublanes).
    bm = max(8, min(block_m, _round_up((M + 1) // 2, 8)))
    Mp = _round_up(M, bm)
    if Mp != M:
        x_flat = jnp.pad(x_flat, ((0, Mp - M), (0, 0)))
    out = pl.pallas_call(
        _conv1x1_bn_relu_kernel,
        out_shape=jax.ShapeDtypeStruct((Mp, C), jnp.bfloat16),
        grid_spec=pltpu.PrefetchScalarGridSpec(
            num_scalar_prefetch=0,
            grid=(Mp // bm,),
            in_specs=[
                pl.BlockSpec((bm, K), lambda i: (i, 0)),
                pl.BlockSpec((K, C), lambda i: (0, 0)),
                pl.BlockSpec((1, C), lambda i: (0, 0)),
                pl.BlockSpec((1, C), lambda i: (0, 0)),
            ],
            out_specs=pl.BlockSpec((bm, C), lambda i: (i, 0)),
        ),
        compiler_params=pltpu.CompilerParams(
            dimension_semantics=("parallel",),
            vmem_limit_bytes=_VMEM_LIMIT),
    )(x_flat, w, scale, bias)
    return out if Mp == M else out[:M]


# ----------------------------------------------------------------------------
# kernel B : conv2 (9 shifted matmuls) + BN2 + ReLU + conv3 + BN3 + shortcut + ReLU
# ----------------------------------------------------------------------------
def _make_tail_kernel(*, stride, H, W, Ho, Wo, has_proj):
    n_tap = 1 if stride == 1 else 4

    def kernel(*refs):
        i = 0
        tap_refs = refs[i:i + n_tap]; i += n_tap
        w2_ref, s2_ref, b2_ref, w3_ref, s3_ref, b3_ref = refs[i:i + 6]; i += 6
        if has_proj:
            xs_ref, wsc_ref, ssc_ref, bsc_ref = refs[i:i + 4]; i += 4
        else:
            res_ref = refs[i]; i += 1
        o_ref = refs[i]; i += 1
        pad_scr = refs[i] if stride == 1 else None

        Pp = w2_ref.shape[-1]

        if stride == 1:
            # Zero-padded h1 lives in a small f32 VMEM scratch; every tap is a
            # unit-stride static slice of it.
            pad_scr[...] = jnp.zeros(pad_scr.shape, pad_scr.dtype)
            pad_scr[1:H + 1, 1:W + 1, :] = tap_refs[0][0].astype(pad_scr.dtype)

            def get_tap(dy, dx):
                return pad_scr[dy:dy + Ho, dx:dx + Wo, :]
        else:
            # Parity planes: tap (dy, dx) -> plane (dy%2, dx%2), unit-stride slice.
            def get_tap(dy, dx):
                p = (dy % 2) * 2 + (dx % 2)
                r0, c0 = dy // 2, dx // 2
                return tap_refs[p][0, r0:r0 + Ho, c0:c0 + Wo, :]

        # conv2 = sum of 9 shifted 1x1 matmuls, f32 accumulation on the MXU.
        acc = jnp.zeros((Ho * Wo, Pp), jnp.float32)
        for t in range(9):
            dy, dx = divmod(t, 3)
            tap = get_tap(dy, dx).astype(jnp.bfloat16).reshape(Ho * Wo, Pp)
            acc = acc + jnp.dot(tap, w2_ref[t], preferred_element_type=jnp.float32)
        h2 = jnp.maximum(acc * s2_ref[...] + b2_ref[...], 0.0).astype(jnp.bfloat16)

        # conv3 (1x1) + BN3 — intermediate never leaves VMEM/registers.
        y = jnp.dot(h2, w3_ref[...], preferred_element_type=jnp.float32)
        y = y * s3_ref[...] + b3_ref[...]

        # shortcut
        if has_proj:
            cin = xs_ref.shape[-1]
            sc = jnp.dot(xs_ref[0].reshape(Ho * Wo, cin), wsc_ref[...],
                         preferred_element_type=jnp.float32)
            sc = sc * ssc_ref[...] + bsc_ref[...]
        else:
            sc = res_ref[0].reshape(Ho * Wo, -1).astype(jnp.float32)

        out = jnp.maximum(y + sc, 0.0)
        o_ref[...] = out.reshape(o_ref.shape).astype(o_ref.dtype)

    return kernel


# ----------------------------------------------------------------------------
# Bottleneck forward (Pallas path)
# ----------------------------------------------------------------------------
def bottleneck_forward_nhwc(x, prep, *, stride, cout):
    N, H, W, cin = x.shape
    Pp = prep["w1"].shape[1]      # lane-padded planes
    Cop = prep["w3"].shape[1]     # lane-padded expansion*planes
    has_proj = "wsc" in prep
    x = x.astype(jnp.float32)

    # ---- kernel A : conv1 + BN1 + ReLU -> bf16, lane-padded channels ----
    h1 = _conv1x1_bn_relu(x.reshape(N * H * W, cin).astype(jnp.bfloat16),
                          prep["w1"], prep["s1"], prep["b1"])
    h1 = h1.reshape(N, H, W, Pp)

    # ---- tap sources for the 3x3 conv (no 9x im2col) ----
    if stride == 1:
        Ho, Wo = H, W
        tap_in = [h1]
        tap_specs = [pl.BlockSpec((1, H, W, Pp), lambda n: (n, 0, 0, 0))]
        scratch = [pltpu.VMEM((H + 2, W + 2, Pp), jnp.float32)]
    elif stride == 2:
        assert H % 2 == 0 and W % 2 == 0, "stride-2 path assumes even H, W"
        Ho, Wo = H // 2, W // 2
        h1p = jnp.pad(h1.astype(jnp.float32), ((0, 0), (1, 1), (1, 1), (0, 0)))
        # 4 row/col-parity planes (total bytes ~= h1); every tap inside the
        # kernel becomes a unit-stride slice of one plane.
        tap_in = [h1p[:, py::2, px::2, :] for py in (0, 1) for px in (0, 1)]
        tap_specs = [pl.BlockSpec((1, Ho + 1, Wo + 1, Pp), lambda n: (n, 0, 0, 0))
                     for _ in range(4)]
        scratch = []
    else:
        # TODO(synk): strides other than 1 / 2 are not implemented.
        raise NotImplementedError("Bottleneck Pallas path supports stride 1 or 2")

    w_in = [prep["w2"], prep["s2"], prep["b2"], prep["w3"], prep["s3"], prep["b3"]]
    w_specs = [pl.BlockSpec((9, Pp, Pp), lambda n: (0, 0, 0)),
               pl.BlockSpec((1, Pp), lambda n: (0, 0)),
               pl.BlockSpec((1, Pp), lambda n: (0, 0)),
               pl.BlockSpec((Pp, Cop), lambda n: (0, 0)),
               pl.BlockSpec((1, Cop), lambda n: (0, 0)),
               pl.BlockSpec((1, Cop), lambda n: (0, 0))]

    if has_proj:
        xs = x[:, ::stride, ::stride, :].astype(jnp.bfloat16)
        sc_in = [xs, prep["wsc"], prep["ssc"], prep["bsc"]]
        sc_specs = [pl.BlockSpec((1, Ho, Wo, cin), lambda n: (n, 0, 0, 0)),
                    pl.BlockSpec((cin, Cop), lambda n: (0, 0)),
                    pl.BlockSpec((1, Cop), lambda n: (0, 0)),
                    pl.BlockSpec((1, Cop), lambda n: (0, 0))]
    else:
        res = x.astype(jnp.bfloat16)
        if Cop != cin:
            res = jnp.pad(res, ((0, 0), (0, 0), (0, 0), (0, Cop - cin)))
        sc_in = [res]
        sc_specs = [pl.BlockSpec((1, H, W, Cop), lambda n: (n, 0, 0, 0))]

    kernel = _make_tail_kernel(stride=stride, H=H, W=W, Ho=Ho, Wo=Wo,
                               has_proj=has_proj)
    out = pl.pallas_call(
        kernel,
        out_shape=jax.ShapeDtypeStruct((N, Ho, Wo, Cop), jnp.float32),
        grid_spec=pltpu.PrefetchScalarGridSpec(
            num_scalar_prefetch=0,
            grid=(N,),                                   # one image per step
            in_specs=tap_specs + w_specs + sc_specs,
            out_specs=pl.BlockSpec((1, Ho, Wo, Cop), lambda n: (n, 0, 0, 0)),
            scratch_shapes=scratch),
        compiler_params=pltpu.CompilerParams(
            dimension_semantics=("parallel",),
            vmem_limit_bytes=_VMEM_LIMIT),
    )(*(tap_in + w_in + sc_in))

    return out if Cop == cout else out[..., :cout]


def bottleneck_forward(x_nchw, prep, *, stride, cout):
    # NCHW (PyTorch) wrapper. When chaining blocks keep activations NHWC and
    # call bottleneck_forward_nhwc directly to avoid per-block layout churn.
    x = jnp.transpose(x_nchw, (0, 2, 3, 1))
    out = bottleneck_forward_nhwc(x, prep, stride=stride, cout=cout)
    return jnp.transpose(out, (0, 3, 1, 2))


# ----------------------------------------------------------------------------
# Parameter prep (done ONCE): kernel layouts, bf16 weights, lane padding
# ----------------------------------------------------------------------------
def prepare_bottleneck_params(params):
    planes, cin = params["conv1_w"].shape[:2]
    cout = params["conv3_w"].shape[0]
    Pp = _round_up(planes, _LANE)
    Cop = _round_up(cout, _LANE)
    prep = {}
    # conv1: [planes, cin, 1, 1] -> [cin, Pp]
    w1 = jnp.transpose(params["conv1_w"][:, :, 0, 0], (1, 0))
    prep["w1"] = _pad_to(w1, (cin, Pp)).astype(jnp.bfloat16)
    s1, b1 = params["bn1"]
    prep["s1"] = _pad_to(s1.reshape(1, -1), (1, Pp))
    prep["b1"] = _pad_to(b1.reshape(1, -1), (1, Pp))
    # conv2: [planes, planes, 3, 3] -> [9 taps, Pp(cin), Pp(cout)]
    w2 = jnp.transpose(params["conv2_w"], (2, 3, 1, 0)).reshape(9, planes, planes)
    prep["w2"] = _pad_to(w2, (9, Pp, Pp)).astype(jnp.bfloat16)
    s2, b2 = params["bn2"]
    prep["s2"] = _pad_to(s2.reshape(1, -1), (1, Pp))
    prep["b2"] = _pad_to(b2.reshape(1, -1), (1, Pp))
    # conv3: [cout, planes, 1, 1] -> [Pp, Cop]
    w3 = jnp.transpose(params["conv3_w"][:, :, 0, 0], (1, 0))
    prep["w3"] = _pad_to(w3, (Pp, Cop)).astype(jnp.bfloat16)
    s3, b3 = params["bn3"]
    prep["s3"] = _pad_to(s3.reshape(1, -1), (1, Cop))
    prep["b3"] = _pad_to(b3.reshape(1, -1), (1, Cop))
    if "sc_w" in params:
        wsc = jnp.transpose(params["sc_w"][:, :, 0, 0], (1, 0))
        prep["wsc"] = _pad_to(wsc, (cin, Cop)).astype(jnp.bfloat16)
        ssc, bsc = params["sc_bn"]
        prep["ssc"] = _pad_to(ssc.reshape(1, -1), (1, Cop))
        prep["bsc"] = _pad_to(bsc.reshape(1, -1), (1, Cop))
    return prep


# ----------------------------------------------------------------------------
# Deterministic parameter init (eval-mode folded BN)
# ----------------------------------------------------------------------------
def _init_conv(key, cout, cin, k):
    fan_in = cin * k * k
    std = (2.0 / fan_in) ** 0.5
    return std * jax.random.normal(key, (cout, cin, k, k), jnp.float32)


def _init_bn(key, c):
    k1, k2, k3, k4 = jax.random.split(key, 4)
    gamma = 1.0 + 0.1 * jax.random.normal(k1, (c,), jnp.float32)
    beta = 0.1 * jax.random.normal(k2, (c,), jnp.float32)
    rmean = 0.1 * jax.random.normal(k3, (c,), jnp.float32)
    rvar = 1.0 + 0.1 * jax.random.uniform(k4, (c,), jnp.float32)
    eps = 1e-5
    scale = gamma / jnp.sqrt(rvar + eps)
    bias = beta - rmean * scale
    return scale, bias


def init_bottleneck_params(key, in_planes, planes, stride, expansion=4):
    ks = iter(jax.random.split(key, 16))
    p = {}
    p["conv1_w"] = _init_conv(next(ks), planes, in_planes, 1)
    p["bn1"] = _init_bn(next(ks), planes)
    p["conv2_w"] = _init_conv(next(ks), planes, planes, 3)
    p["bn2"] = _init_bn(next(ks), planes)
    p["conv3_w"] = _init_conv(next(ks), expansion * planes, planes, 1)
    p["bn3"] = _init_bn(next(ks), expansion * planes)
    if stride != 1 or in_planes != expansion * planes:
        p["sc_w"] = _init_conv(next(ks), expansion * planes, in_planes, 1)
        p["sc_bn"] = _init_bn(next(ks), expansion * planes)
    return p


# ----------------------------------------------------------------------------
# Plain-JAX reference (same bf16 matmul inputs / f32 accumulation)
# ----------------------------------------------------------------------------
def _conv_ref(x_nhwc, w_oihw, stride, pad):
    wt = jnp.transpose(w_oihw, (2, 3, 1, 0)).astype(jnp.bfloat16)
    return lax.conv_general_dilated(
        x_nhwc.astype(jnp.bfloat16), wt, (stride, stride),
        [(pad, pad), (pad, pad)],
        dimension_numbers=("NHWC", "HWIO", "NHWC"),
        preferred_element_type=jnp.float32)


def bottleneck_reference(x_nchw, params, *, stride):
    x = jnp.transpose(x_nchw, (0, 2, 3, 1)).astype(jnp.float32)
    s1, b1 = params["bn1"]
    s2, b2 = params["bn2"]
    s3, b3 = params["bn3"]
    h = jnp.maximum(_conv_ref(x, params["conv1_w"], 1, 0) * s1 + b1, 0.0)
    h = jnp.maximum(_conv_ref(h, params["conv2_w"], stride, 1) * s2 + b2, 0.0)
    y = _conv_ref(h, params["conv3_w"], 1, 0) * s3 + b3
    if "sc_w" in params:
        ssc, bsc = params["sc_bn"]
        sc = _conv_ref(x, params["sc_w"], stride, 0) * ssc + bsc
    else:
        sc = x
    out = jnp.maximum(y + sc, 0.0)
    return jnp.transpose(out, (0, 3, 1, 2))


# ----------------------------------------------------------------------------
if __name__ == "__main__":
    key = jax.random.PRNGKey(0)
    kx1, kx2, kp1, kp2 = jax.random.split(key, 4)

    # Case 1: projection shortcut (stride=2, in_planes != 4*planes).
    in_planes, planes, stride = 64, 32, 2
    x1 = jax.random.normal(kx1, (2, in_planes, 16, 16), jnp.float32)
    params1 = init_bottleneck_params(kp1, in_planes, planes, stride)
    prep1 = prepare_bottleneck_params(params1)
    fwd1 = jax.jit(functools.partial(bottleneck_forward, stride=stride,
                                     cout=4 * planes))
    out1 = fwd1(x1, prep1)
    jax.block_until_ready(out1)
    assert out1.shape == (2, 4 * planes, 8, 8)
    ref1 = bottleneck_reference(x1, params1, stride=stride)
    assert jnp.allclose(out1, ref1, rtol=2e-2, atol=2e-2)

    # Case 2: identity shortcut (stride=1, in_planes == 4*planes).
    in_planes2, planes2, stride2 = 128, 32, 1
    x2 = jax.random.normal(kx2, (2, in_planes2, 8, 8), jnp.float32)
    params2 = init_bottleneck_params(kp2, in_planes2, planes2, stride2)
    prep2 = prepare_bottleneck_params(params2)
    fwd2 = jax.jit(functools.partial(bottleneck_forward, stride=stride2,
                                     cout=4 * planes2))
    out2 = fwd2(x2, prep2)
    jax.block_until_ready(out2)
    assert out2.shape == (2, 4 * planes2, 8, 8)
    ref2 = bottleneck_reference(x2, params2, stride=stride2)
    assert jnp.allclose(out2, ref2, rtol=2e-2, atol=2e-2)

    print("KERNEL_OK")
</pallas_src>

<mosaic_0001>
module attributes {stable_mosaic.version = 11 : i64} {
  func.func @_conv1x1_bn_relu_kernel(%arg0: i32, %arg1: memref<256x64xbf16, #tpu.memory_space<vmem>>, %arg2: memref<64x128xbf16, #tpu.memory_space<vmem>>, %arg3: memref<1x128xf32, #tpu.memory_space<vmem>>, %arg4: memref<1x128xf32, #tpu.memory_space<vmem>>, %arg5: memref<256x128xbf16, #tpu.memory_space<vmem>>) attributes {dimension_semantics = [#tpu.dimension_semantics<parallel>], iteration_bounds = array<i64: 2>, scalar_prefetch = 0 : i64, scratch_operands = 0 : i64, tpu.core_type = #tpu.core_type<tc>, window_params = [{transform_indices = @transform_0, window_bounds = array<i64: 256, 64>}, {pipeline_mode = #tpu.pipeline_mode<synchronous>, transform_indices = @transform_1, window_bounds = array<i64: 64, 128>}, {pipeline_mode = #tpu.pipeline_mode<synchronous>, transform_indices = @transform_2, window_bounds = array<i64: 1, 128>}, {pipeline_mode = #tpu.pipeline_mode<synchronous>, transform_indices = @transform_3, window_bounds = array<i64: 1, 128>}, {transform_indices = @transform_4, window_bounds = array<i64: 256, 128>}]} {
    %c0 = arith.constant 0 : index
    %c0_0 = arith.constant 0 : index
    %0 = vector.load %arg1[%c0, %c0_0] : memref<256x64xbf16, #tpu.memory_space<vmem>>, vector<256x64xbf16>
    %c0_1 = arith.constant 0 : index
    %c0_2 = arith.constant 0 : index
    %1 = vector.load %arg2[%c0_1, %c0_2] : memref<64x128xbf16, #tpu.memory_space<vmem>>, vector<64x128xbf16>
    %cst = arith.constant dense<0.000000e+00> : vector<256x128xf32>
    %2 = tpu.matmul %0, %1, %cst {dimension_numbers = #tpu.dot_dimension_numbers<[1], [0], [0], [1], [0, 0, 1, 1], [], []>} : vector<256x64xbf16>, vector<64x128xbf16>, vector<256x128xf32> -> vector<256x128xf32>
    %c0_3 = arith.constant 0 : index
    %c0_4 = arith.constant 0 : index
    %3 = vector.load %arg3[%c0_3, %c0_4] : memref<1x128xf32, #tpu.memory_space<vmem>>, vector<1x128xf32>
    %4 = vector.broadcast %3 : vector<1x128xf32> to vector<256x128xf32>
    %5 = arith.mulf %2, %4 : vector<256x128xf32>
    %c0_5 = arith.constant 0 : index
    %c0_6 = arith.constant 0 : index
    %6 = vector.load %arg4[%c0_5, %c0_6] : memref<1x128xf32, #tpu.memory_space<vmem>>, vector<1x128xf32>
    %7 = vector.broadcast %6 : vector<1x128xf32> to vector<256x128xf32>
    %8 = arith.addf %5, %7 : vector<256x128xf32>
    %cst_7 = arith.constant 0.000000e+00 : f32
    %9 = vector.broadcast %cst_7 : f32 to vector<256x128xf32>
    %10 = arith.maximumf %8, %9 : vector<256x128xf32>
    %11 = arith.truncf %10 : vector<256x128xf32> to vector<256x128xbf16>
    %c0_8 = arith.constant 0 : index
    %c0_9 = arith.constant 0 : index
    %12 = vector.load %arg5[%c0_8, %c0_9] : memref<256x128xbf16, #tpu.memory_space<vmem>>, vector<256x128xbf16>
    tpu.vector_store %arg5[%c0_8, %c0_9], %11 {strides = array<i32>} : memref<256x128xbf16, #tpu.memory_space<vmem>>, vector<256x128xbf16>,
    return
  }
  func.func @transform_0(%arg0: i32) -> (i32, i32) {
    %c0_i32 = arith.constant 0 : i32
    %c0_i32_0 = arith.constant 0 : i32
    return %arg0, %c0_i32 : i32, i32
  }
  func.func @transform_1(%arg0: i32) -> (i32, i32) {
    %c0_i32 = arith.constant 0 : i32
    %c0_i32_0 = arith.constant 0 : i32
    %c0_i32_1 = arith.constant 0 : i32
    return %c0_i32, %c0_i32_0 : i32, i32
  }
  func.func @transform_2(%arg0: i32) -> (i32, i32) {
    %c0_i32 = arith.constant 0 : i32
    %c0_i32_0 = arith.constant 0 : i32
    %c0_i32_1 = arith.constant 0 : i32
    return %c0_i32, %c0_i32_0 : i32, i32
  }
  func.func @transform_3(%arg0: i32) -> (i32, i32) {
    %c0_i32 = arith.constant 0 : i32
    %c0_i32_0 = arith.constant 0 : i32
    %c0_i32_1 = arith.constant 0 : i32
    return %c0_i32, %c0_i32_0 : i32, i32
  }
  func.func @transform_4(%arg0: i32) -> (i32, i32) {
    %c0_i32 = arith.constant 0 : i32
    %c0_i32_0 = arith.constant 0 : i32
    return %arg0, %c0_i32 : i32, i32
  }
}

module attributes {stable_mosaic.version = 11 : i64} {
  func.func @kernel(%arg0: i32, %arg1: memref<1x9x9x128xf32, #tpu.memory_space<vmem>>, %arg2: memref<1x9x9x128xf32, #tpu.memory_space<vmem>>, %arg3: memref<1x9x9x128xf32, #tpu.memory_space<vmem>>, %arg4: memref<1x9x9x128xf32, #tpu.memory_space<vmem>>, %arg5: memref<9x128x128xbf16, #tpu.memory_space<vmem>>, %arg6: memref<1x128xf32, #tpu.memory_space<vmem>>, %arg7: memref<1x128xf32, #tpu.memory_space<vmem>>, %arg8: memref<128x128xbf16, #tpu.memory_space<vmem>>, %arg9: memref<1x128xf32, #tpu.memory_space<vmem>>, %arg10: memref<1x128xf32, #tpu.memory_space<vmem>>, %arg11: memref<1x8x8x64xbf16, #tpu.memory_space<vmem>>, %arg12: memref<64x128xbf16, #tpu.memory_space<vmem>>, %arg13: memref<1x128xf32, #tpu.memory_space<vmem>>, %arg14: memref<1x128xf32, #tpu.memory_space<vmem>>, %arg15: memref<1x8x8x128xf32, #tpu.memory_space<vmem>>) attributes {dimension_semantics = [#tpu.dimension_semantics<parallel>], iteration_bounds = array<i64: 2>, scalar_prefetch = 0 : i64, scratch_operands = 0 : i64, tpu.core_type = #tpu.core_type<tc>, window_params = [{transform_indices = @transform_0, window_bounds = array<i64: 1, 9, 9, 128>}, {transform_indices = @transform_1, window_bounds = array<i64: 1, 9, 9, 128>}, {transform_indices = @transform_2, window_bounds = array<i64: 1, 9, 9, 128>}, {transform_indices = @transform_3, window_bounds = array<i64: 1, 9, 9, 128>}, {pipeline_mode = #tpu.pipeline_mode<synchronous>, transform_indices = @transform_4, window_bounds = array<i64: 9, 128, 128>}, {pipeline_mode = #tpu.pipeline_mode<synchronous>, transform_indices = @transform_5, window_bounds = array<i64: 1, 128>}, {pipeline_mode = #tpu.pipeline_mode<synchronous>, transform_indices = @transform_6, window_bounds = array<i64: 1, 128>}, {pipeline_mode = #tpu.pipeline_mode<synchronous>, transform_indices = @transform_7, window_bounds = array<i64: 128, 128>}, {pipeline_mode = #tpu.pipeline_mode<synchronous>, transform_indices = @transform_8, window_bounds = array<i64: 1, 128>}, {pipeline_mode = #tpu.pipeline_mode<synchronous>, transform_indices = @transform_9, window_bounds = array<i64: 1, 128>}, {transform_indices = @transform_10, window_bounds = array<i64: 1, 8, 8, 64>}, {pipeline_mode = #tpu.pipeline_mode<synchronous>, transform_indices = @transform_11, window_bounds = array<i64: 64, 128>}, {pipeline_mode = #tpu.pipeline_mode<synchronous>, transform_indices = @transform_12, window_bounds = array<i64: 1, 128>}, {pipeline_mode = #tpu.pipeline_mode<synchronous>, transform_indices = @transform_13, window_bounds = array<i64: 1, 128>}, {transform_indices = @transform_14, window_bounds = array<i64: 1, 8, 8, 128>}]} {
    %cst = arith.constant 0.000000e+00 : f32
    %0 = vector.broadcast %cst : f32 to vector<64x128xf32>
    %c0 = arith.constant 0 : index
    %c0_0 = arith.constant 0 : index
    %c0_1 = arith.constant 0 : index
    %c0_2 = arith.constant 0 : index
    %1 = vector.load %arg1[%c0, %c0_0, %c0_1, %c0_2] : memref<1x9x9x128xf32, #tpu.memory_space<vmem>>, vector<1x8x8x128xf32>
    %2 = vector.shape_cast %1 : vector<1x8x8x128xf32> to vector<8x8x128xf32>
    %3 = arith.truncf %2 : vector<8x8x128xf32> to vector<8x8x128xbf16>
    %4 = vector.shape_cast %3 : vector<8x8x128xbf16> to vector<64x128xbf16>
    %c0_3 = arith.constant 0 : index
    %c0_4 = arith.constant 0 : index
    %c0_5 = arith.constant 0 : index
    %5 = vector.load %arg5[%c0_3, %c0_4, %c0_5] : memref<9x128x128xbf16, #tpu.memory_space<vmem>>, vector<1x128x128xbf16>
    %6 = vector.shape_cast %5 : vector<1x128x128xbf16> to vector<128x128xbf16>
    %cst_6 = arith.constant dense<0.000000e+00> : vector<64x128xf32>
    %7 = tpu.matmul %4, %6, %cst_6 {dimension_numbers = #tpu.dot_dimension_numbers<[1], [0], [0], [1], [0, 0, 1, 1], [], []>} : vector<64x128xbf16>, vector<128x128xbf16>, vector<64x128xf32> -> vector<64x128xf32>
    %8 = arith.addf %0, %7 : vector<64x128xf32>
    %c0_7 = arith.constant 0 : index
    %c0_8 = arith.constant 0 : index
    %c0_9 = arith.constant 0 : index
    %c0_10 = arith.constant 0 : index
    %9 = vector.load %arg2[%c0_7, %c0_8, %c0_9, %c0_10] : memref<1x9x9x128xf32, #tpu.memory_space<vmem>>, vector<1x8x8x128xf32>
    %10 = vector.shape_cast %9 : vector<1x8x8x128xf32> to vector<8x8x128xf32>
    %11 = arith.truncf %10 : vector<8x8x128xf32> to vector<8x8x128xbf16>
    %12 = vector.shape_cast %11 : vector<8x8x128xbf16> to vector<64x128xbf16>
    %c1 = arith.constant 1 : index
    %c0_11 = arith.constant 0 : index
    %c0_12 = arith.constant 0 : index
    %13 = vector.load %arg5[%c1, %c0_11, %c0_12] : memref<9x128x128xbf16, #tpu.memory_space<vmem>>, vector<1x128x128xbf16>
    %14 = vector.shape_cast %13 : vector<1x128x128xbf16> to vector<128x128xbf16>
    %cst_13 = arith.constant dense<0.000000e+00> : vector<64x128xf32>
    %15 = tpu.matmul %12, %14, %cst_13 {dimension_numbers = #tpu.dot_dimension_numbers<[1], [0], [0], [1], [0, 0, 1, 1], [], []>} : vector<64x128xbf16>, vector<128x128xbf16>, vector<64x128xf32> -> vector<64x128xf32>
    %16 = arith.addf %8, %15 : vector<64x128xf32>
    %c0_14 = arith.constant 0 : index
    %c0_15 = arith.constant 0 : index
    %c1_16 = arith.constant 1 : index
    %c0_17 = arith.constant 0 : index
    %17 = vector.load %arg1[%c0_14, %c0_15, %c1_16, %c0_17] : memref<1x9x9x128xf32, #tpu.memory_space<vmem>>, vector<1x8x8x128xf32>
    %18 = vector.shape_cast %17 : vector<1x8x8x128xf32> to vector<8x8x128xf32>
    %19 = arith.truncf %18 : vector<8x8x128xf32> to vector<8x8x128xbf16>
    %20 = vector.shape_cast %19 : vector<8x8x128xbf16> to vector<64x128xbf16>
    %c2 = arith.constant 2 : index
    %c0_18 = arith.constant 0 : index
    %c0_19 = arith.constant 0 : index
    %21 = vector.load %arg5[%c2, %c0_18, %c0_19] : memref<9x128x128xbf16, #tpu.memory_space<vmem>>, vector<1x128x128xbf16>
    %22 = vector.shape_cast %21 : vector<1x128x128xbf16> to vector<128x128xbf16>
    %cst_20 = arith.constant dense<0.000000e+00> : vector<64x128xf32>
    %23 = tpu.matmul %20, %22, %cst_20 {dimension_numbers = #tpu.dot_dimension_numbers<[1], [0], [0], [1], [0, 0, 1, 1], [], []>} : vector<64x128xbf16>, vector<128x128xbf16>, vector<64x128xf32> -> vector<64x128xf32>
    %24 = arith.addf %16, %23 : vector<64x128xf32>
    %c0_21 = arith.constant 0 : index
    %c0_22 = arith.constant 0 : index
    %c0_23 = arith.constant 0 : index
    %c0_24 = arith.constant 0 : index
    %25 = vector.load %arg3[%c0_21, %c0_22, %c0_23, %c0_24] : memref<1x9x9x128xf32, #tpu.memory_space<vmem>>, vector<1x8x8x128xf32>
    %26 = vector.shape_cast %25 : vector<1x8x8x128xf32> to vector<8x8x128xf32>
    %27 = arith.truncf %26 : vector<8x8x128xf32> to vector<8x8x128xbf16>
    %28 = vector.shape_cast %27 : vector<8x8x128xbf16> to vector<64x128xbf16>
    %c3 = arith.constant 3 : index
    %c0_25 = arith.constant 0 : index
    %c0_26 = arith.constant 0 : index
    %29 = vector.load %arg5[%c3, %c0_25, %c0_26] : memref<9x128x128xbf16, #tpu.memory_space<vmem>>, vector<1x128x128xbf16>
    %30 = vector.shape_cast %29 : vector<1x128x128xbf16> to vector<128x128xbf16>
    %cst_27 = arith.constant dense<0.000000e+00> : vector<64x128xf32>
    %31 = tpu.matmul %28, %30, %cst_27 {dimension_numbers = #tpu.dot_dimension_numbers<[1], [0], [0], [1], [0, 0, 1, 1], [], []>} : vector<64x128xbf16>, vector<128x128xbf16>, vector<64x128xf32> -> vector<64x128xf32>
    %32 = arith.addf %24, %31 : vector<64x128xf32>
    %c0_28 = arith.constant 0 : index
    %c0_29 = arith.constant 0 : index
    %c0_30 = arith.constant 0 : index
    %c0_31 = arith.constant 0 : index
    %33 = vector.load %arg4[%c0_28, %c0_29, %c0_30, %c0_31] : memref<1x9x9x128xf32, #tpu.memory_space<vmem>>, vector<1x8x8x128xf32>
    %34 = vector.shape_cast %33 : vector<1x8x8x128xf32> to vector<8x8x128xf32>
    %35 = arith.truncf %34 : vector<8x8x128xf32> to vector<8x8x128xbf16>
    %36 = vector.shape_cast %35 : vector<8x8x128xbf16> to vector<64x128xbf16>
    %c4 = arith.constant 4 : index
    %c0_32 = arith.constant 0 : index
    %c0_33 = arith.constant 0 : index
    %37 = vector.load %arg5[%c4, %c0_32, %c0_33] : memref<9x128x128xbf16, #tpu.memory_space<vmem>>, vector<1x128x128xbf16>
    %38 = vector.shape_cast %37 : vector<1x128x128xbf16> to vector<128x128xbf16>
    %cst_34 = arith.constant dense<0.000000e+00> : vector<64x128xf32>
    %39 = tpu.matmul %36, %38, %cst_34 {dimension_numbers = #tpu.dot_dimension_numbers<[1], [0], [0], [1], [0, 0, 1, 1], [], []>} : vector<64x128xbf16>, vector<128x128xbf16>, vector<64x128xf32> -> vector<64x128xf32>
    %40 = arith.addf %32, %39 : vector<64x128xf32>
    %c0_35 = arith.constant 0 : index
    %c0_36 = arith.constant 0 : index
    %c1_37 = arith.constant 1 : index
    %c0_38 = arith.constant 0 : index
    %41 = vector.load %arg3[%c0_35, %c0_36, %c1_37, %c0_38] : memref<1x9x9x128xf32, #tpu.memory_space<vmem>>, vector<1x8x8x128xf32>
    %42 = vector.shape_cast %41 : vector<1x8x8x128xf32> to vector<8x8x128xf32>
    %43 = arith.truncf %42 : vector<8x8x128xf32> to vector<8x8x128xbf16>
    %44 = vector.shape_cast %43 : vector<8x8x128xbf16> to vector<64x128xbf16>
    %c5 = arith.constant 5 : index
    %c0_39 = arith.constant 0 : index
    %c0_40 = arith.constant 0 : index
    %45 = vector.load %arg5[%c5, %c0_39, %c0_40] : memref<9x128x128xbf16, #tpu.memory_space<vmem>>, vector<1x128x128xbf16>
    %46 = vector.shape_cast %45 : vector<1x128x128xbf16> to vector<128x128xbf16>
    %cst_41 = arith.constant dense<0.000000e+00> : vector<64x128xf32>
    %47 = tpu.matmul %44, %46, %cst_41 {dimension_numbers = #tpu.dot_dimension_numbers<[1], [0], [0], [1], [0, 0, 1, 1], [], []>} : vector<64x128xbf16>, vector<128x128xbf16>, vector<64x128xf32> -> vector<64x128xf32>
    %48 = arith.addf %40, %47 : vector<64x128xf32>
    %c0_42 = arith.constant 0 : index
    %c1_43 = arith.constant 1 : index
    %c0_44 = arith.constant 0 : index
    %c0_45 = arith.constant 0 : index
    %49 = vector.load %arg1[%c0_42, %c1_43, %c0_44, %c0_45] : memref<1x9x9x128xf32, #tpu.memory_space<vmem>>, vector<1x8x8x128xf32>
    %50 = vector.shape_cast %49 : vector<1x8x8x128xf32> to vector<8x8x128xf32>
    %51 = arith.truncf %50 : vector<8x8x128xf32> to vector<8x8x128xbf16>
    %52 = vector.shape_cast %51 : vector<8x8x128xbf16> to vector<64x128xbf16>
    %c6 = arith.constant 6 : index
    %c0_46 = arith.constant 0 : index
    %c0_47 = arith.constant 0 : index
    %53 = vector.load %arg5[%c6, %c0_46, %c0_47] : memref<9x128x128xbf16, #tpu.memory_space<vmem>>, vector<1x128x128xbf16>
    %54 = vector.shape_cast %53 : vector<1x128x128xbf16> to vector<128x128xbf16>
    %cst_48 = arith.constant dense<0.000000e+00> : vector<64x128xf32>
    %55 = tpu.matmul %52, %54, %cst_48 {dimension_numbers = #tpu.dot_dimension_numbers<[1], [0], [0], [1], [0, 0, 1, 1], [], []>} : vector<64x128xbf16>, vector<128x128xbf16>, vector<64x128xf32> -> vector<64x128xf32>
    %56 = arith.addf %48, %55 : vector<64x128xf32>
    %c0_49 = arith.constant 0 : index
    %c1_50 = arith.constant 1 : index
    %c0_51 = arith.constant 0 : index
    %c0_52 = arith.constant 0 : index
    %57 = vector.load %arg2[%c0_49, %c1_50, %c0_51, %c0_52] : memref<1x9x9x128xf32, #tpu.memory_space<vmem>>, vector<1x8x8x128xf32>
    %58 = vector.shape_cast %57 : vector<1x8x8x128xf32> to vector<8x8x128xf32>
    %59 = arith.truncf %58 : vector<8x8x128xf32> to vector<8x8x128xbf16>
    %60 = vector.shape_cast %59 : vector<8x8x128xbf16> to vector<64x128xbf16>
    %c7 = arith.constant 7 : index
    %c0_53 = arith.constant 0 : index
    %c0_54 = arith.constant 0 : index
    %61 = vector.load %arg5[%c7, %c0_53, %c0_54] : memref<9x128x128xbf16, #tpu.memory_space<vmem>>, vector<1x128x128xbf16>
    %62 = vector.shape_cast %61 : vector<1x128x128xbf16> to vector<128x128xbf16>
    %cst_55 = arith.constant dense<0.000000e+00> : vector<64x128xf32>
    %63 = tpu.matmul %60, %62, %cst_55 {dimension_numbers = #tpu.dot_dimension_numbers<[1], [0], [0], [1], [0, 0, 1, 1], [], []>} : vector<64x128xbf16>, vector<128x128xbf16>, vector<64x128xf32> -> vector<64x128xf32>
    %64 = arith.addf %56, %63 : vector<64x128xf32>
    %c0_56 = arith.constant 0 : index
    %c1_57 = arith.constant 1 : index
    %c1_58 = arith.constant 1 : index
    %c0_59 = arith.constant 0 : index
    %65 = vector.load %arg1[%c0_56, %c1_57, %c1_58, %c0_59] : memref<1x9x9x128xf32, #tpu.memory_space<vmem>>, vector<1x8x8x128xf32>
    %66 = vector.shape_cast %65 : vector<1x8x8x128xf32> to vector<8x8x128xf32>
    %67 = arith.truncf %66 : vector<8x8x128xf32> to vector<8x8x128xbf16>
    %68 = vector.shape_cast %67 : vector<8x8x128xbf16> to vector<64x128xbf16>
    %c8 = arith.constant 8 : index
    %c0_60 = arith.constant 0 : index
    %c0_61 = arith.constant 0 : index
    %69 = vector.load %arg5[%c8, %c0_60, %c0_61] : memref<9x128x128xbf16, #tpu.memory_space<vmem>>, vector<1x128x128xbf16>
    %70 = vector.shape_cast %69 : vector<1x128x128xbf16> to vector<128x128xbf16>
    %cst_62 = arith.constant dense<0.000000e+00> : vector<64x128xf32>
    %71 = tpu.matmul %68, %70, %cst_62 {dimension_numbers = #tpu.dot_dimension_numbers<[1], [0], [0], [1], [0, 0, 1, 1], [], []>} : vector<64x128xbf16>, vector<128x128xbf16>, vector<64x128xf32> -> vector<64x128xf32>
    %72 = arith.addf %64, %71 : vector<64x128xf32>
    %c0_63 = arith.constant 0 : index
    %c0_64 = arith.constant 0 : index
    %73 = vector.load %arg6[%c0_63, %c0_64] : memref<1x128xf32, #tpu.memory_space<vmem>>, vector<1x128xf32>
    %74 = vector.broadcast %73 : vector<1x128xf32> to vector<64x128xf32>
    %75 = arith.mulf %72, %74 : vector<64x128xf32>
    %c0_65 = arith.constant 0 : index
    %c0_66 = arith.constant 0 : index
    %76 = vector.load %arg7[%c0_65, %c0_66] : memref<1x128xf32, #tpu.memory_space<vmem>>, vector<1x128xf32>
    %77 = vector.broadcast %76 : vector<1x128xf32> to vector<64x128xf32>
    %78 = arith.addf %75, %77 : vector<64x128xf32>
    %cst_67 = arith.constant 0.000000e+00 : f32
    %79 = vector.broadcast %cst_67 : f32 to vector<64x128xf32>
    %80 = arith.maximumf %78, %79 : vector<64x128xf32>
    %81 = arith.truncf %80 : vector<64x128xf32> to vector<64x128xbf16>
    %c0_68 = arith.constant 0 : index
    %c0_69 = arith.constant 0 : index
    %82 = vector.load %arg8[%c0_68, %c0_69] : memref<128x128xbf16, #tpu.memory_space<vmem>>, vector<128x128xbf16>
    %cst_70 = arith.constant dense<0.000000e+00> : vector<64x128xf32>
    %83 = tpu.matmul %81, %82, %cst_70 {dimension_numbers = #tpu.dot_dimension_numbers<[1], [0], [0], [1], [0, 0, 1, 1], [], []>} : vector<64x128xbf16>, vector<128x128xbf16>, vector<64x128xf32> -> vector<64x128xf32>
    %c0_71 = arith.constant 0 : index
    %c0_72 = arith.constant 0 : index
    %84 = vector.load %arg9[%c0_71, %c0_72] : memref<1x128xf32, #tpu.memory_space<vmem>>, vector<1x128xf32>
    %85 = vector.broadcast %84 : vector<1x128xf32> to vector<64x128xf32>
    %86 = arith.mulf %83, %85 : vector<64x128xf32>
    %c0_73 = arith.constant 0 : index
    %c0_74 = arith.constant 0 : index
    %87 = vector.load %arg10[%c0_73, %c0_74] : memref<1x128xf32, #tpu.memory_space<vmem>>, vector<1x128xf32>
    %88 = vector.broadcast %87 : vector<1x128xf32> to vector<64x128xf32>
    %89 = arith.addf %86, %88 : vector<64x128xf32>
    %c0_75 = arith.constant 0 : index
    %c0_76 = arith.constant 0 : index
    %c0_77 = arith.constant 0 : index
    %c0_78 = arith.constant 0 : index
    %90 = vector.load %arg11[%c0_75, %c0_76, %c0_77, %c0_78] : memref<1x8x8x64xbf16, #tpu.memory_space<vmem>>, vector<1x8x8x64xbf16>
    %91 = vector.shape_cast %90 : vector<1x8x8x64xbf16> to vector<8x8x64xbf16>
    %92 = vector.shape_cast %91 : vector<8x8x64xbf16> to vector<64x64xbf16>
    %c0_79 = arith.constant 0 : index
    %c0_80 = arith.constant 0 : index
    %93 = vector.load %arg12[%c0_79, %c0_80] : memref<64x128xbf16, #tpu.memory_space<vmem>>, vector<64x128xbf16>
    %cst_81 = arith.constant dense<0.000000e+00> : vector<64x128xf32>
    %94 = tpu.matmul %92, %93, %cst_81 {dimension_numbers = #tpu.dot_dimension_numbers<[1], [0], [0], [1], [0, 0, 1, 1], [], []>} : vector<64x64xbf16>, vector<64x128xbf16>, vector<64x128xf32> -> vector<64x128xf32>
    %c0_82 = arith.constant 0 : index
    %c0_83 = arith.constant 0 : index
    %95 = vector.load %arg13[%c0_82, %c0_83] : memref<1x128xf32, #tpu.memory_space<vmem>>, vector<1x128xf32>
    %96 = vector.broadcast %95 : vector<1x128xf32> to vector<64x128xf32>
    %97 = arith.mulf %94, %96 : vector<64x128xf32>
    %c0_84 = arith.constant 0 : index
    %c0_85 = arith.constant 0 : index
    %98 = vector.load %arg14[%c0_84, %c0_85] : memref<1x128xf32, #tpu.memory_space<vmem>>, vector<1x128xf32>
    %99 = vector.broadcast %98 : vector<1x128xf32> to vector<64x128xf32>
    %100 = arith.addf %97, %99 : vector<64x128xf32>
    %101 = arith.addf %89, %100 : vector<64x128xf32>
    %cst_86 = arith.constant 0.000000e+00 : f32
    %102 = vector.broadcast %cst_86 : f32 to vector<64x128xf32>
    %103 = arith.maximumf %101, %102 : vector<64x128xf32>
    %104 = vector.shape_cast %103 : vector<64x128xf32> to vector<1x8x8x128xf32>
    %c0_87 = arith.constant 0 : index
    %c0_88 = arith.constant 0 : index
    %c0_89 = arith.constant 0 : index
    %c0_90 = arith.constant 0 : index
    %105 = vector.load %arg15[%c0_87, %c0_88, %c0_89, %c0_90] : memref<1x8x8x128xf32, #tpu.memory_space<vmem>>, vector<1x8x8x128xf32>
    tpu.vector_store %arg15[%c0_87, %c0_88, %c0_89, %c0_90], %104 {strides = array<i32>} : memref<1x8x8x128xf32, #tpu.memory_space<vmem>>, vector<1x8x8x128xf32>,
    return
  }
  func.func @transform_0(%arg0: i32) -> (i32, i32, i32, i32) {
    %c0_i32 = arith.constant 0 : i32
    %c0_i32_0 = arith.constant 0 : i32
    %c0_i32_1 = arith.constant 0 : i32
    %c0_i32_2 = arith.constant 0 : i32
    return %arg0, %c0_i32, %c0_i32_0, %c0_i32_1 : i32, i32, i32, i32
  }
  func.func @transform_1(%arg0: i32) -> (i32, i32, i32, i32) {
    %c0_i32 = arith.constant 0 : i32
    %c0_i32_0 = arith.constant 0 : i32
    %c0_i32_1 = arith.constant 0 : i32
    %c0_i32_2 = arith.constant 0 : i32
    return %arg0, %c0_i32, %c0_i32_0, %c0_i32_1 : i32, i32, i32, i32
  }
  func.func @transform_2(%arg0: i32) -> (i32, i32, i32, i32) {
    %c0_i32 = arith.constant 0 : i32
    %c0_i32_0 = arith.constant 0 : i32
    %c0_i32_1 = arith.constant 0 : i32
    %c0_i32_2 = arith.constant 0 : i32
    return %arg0, %c0_i32, %c0_i32_0, %c0_i32_1 : i32, i32, i32, i32
  }
  func.func @transform_3(%arg0: i32) -> (i32, i32, i32, i32) {
    %c0_i32 = arith.constant 0 : i32
    %c0_i32_0 = arith.constant 0 : i32
    %c0_i32_1 = arith.constant 0 : i32
    %c0_i32_2 = arith.constant 0 : i32
    return %arg0, %c0_i32, %c0_i32_0, %c0_i32_1 : i32, i32, i32, i32
  }
  func.func @transform_4(%arg0: i32) -> (i32, i32, i32) {
    %c0_i32 = arith.constant 0 : i32
    %c0_i32_0 = arith.constant 0 : i32
    %c0_i32_1 = arith.constant 0 : i32
    %c0_i32_2 = arith.constant 0 : i32
    return %c0_i32, %c0_i32_0, %c0_i32_1 : i32, i32, i32
  }
  func.func @transform_5(%arg0: i32) -> (i32, i32) {
    %c0_i32 = arith.constant 0 : i32
    %c0_i32_0 = arith.constant 0 : i32
    %c0_i32_1 = arith.constant 0 : i32
    return %c0_i32, %c0_i32_0 : i32, i32
  }
  func.func @transform_6(%arg0: i32) -> (i32, i32) {
    %c0_i32 = arith.constant 0 : i32
    %c0_i32_0 = arith.constant 0 : i32
    %c0_i32_1 = arith.constant 0 : i32
    return %c0_i32, %c0_i32_0 : i32, i32
  }
  func.func @transform_7(%arg0: i32) -> (i32, i32) {
    %c0_i32 = arith.constant 0 : i32
    %c0_i32_0 = arith.constant 0 : i32
    %c0_i32_1 = arith.constant 0 : i32
    return %c0_i32, %c0_i32_0 : i32, i32
  }
  func.func @transform_8(%arg0: i32) -> (i32, i32) {
    %c0_i32 = arith.constant 0 : i32
    %c0_i32_0 = arith.constant 0 : i32
    %c0_i32_1 = arith.constant 0 : i32
    return %c0_i32, %c0_i32_0 : i32, i32
  }
  func.func @transform_9(%arg0: i32) -> (i32, i32) {
    %c0_i32 = arith.constant 0 : i32
    %c0_i32_0 = arith.constant 0 : i32
    %c0_i32_1 = arith.constant 0 : i32
    return %c0_i32, %c0_i32_0 : i32, i32
  }
  func.func @transform_10(%arg0: i32) -> (i32, i32, i32, i32) {
    %c0_i32 = arith.constant 0 : i32
    %c0_i32_0 = arith.constant 0 : i32
    %c0_i32_1 = arith.constant 0 : i32
    %c0_i32_2 = arith.constant 0 : i32
    return %arg0, %c0_i32, %c0_i32_0, %c0_i32_1 : i32, i32, i32, i32
  }
  func.func @transform_11(%arg0: i32) -> (i32, i32) {
    %c0_i32 = arith.constant 0 : i32
    %c0_i32_0 = arith.constant 0 : i32
    %c0_i32_1 = arith.constant 0 : i32
    return %c0_i32, %c0_i32_0 : i32, i32
  }
  func.func @transform_12(%arg0: i32) -> (i32, i32) {
    %c0_i32 = arith.constant 0 : i32
    %c0_i32_0 = arith.constant 0 : i32
    %c0_i32_1 = arith.constant 0 : i32
    return %c0_i32, %c0_i32_0 : i32, i32
  }
  func.func @transform_13(%arg0: i32) -> (i32, i32) {
    %c0_i32 = arith.constant 0 : i32
    %c0_i32_0 = arith.constant 0 : i32
    %c0_i32_1 = arith.constant 0 : i32
    return %c0_i32, %c0_i32_0 : i32, i32
  }
  func.func @transform_14(%arg0: i32) -> (i32, i32, i32, i32) {
    %c0_i32 = arith.constant 0 : i32
    %c0_i32_0 = arith.constant 0 : i32
    %c0_i32_1 = arith.constant 0 : i32
    %c0_i32_2 = arith.constant 0 : i32
    return %arg0, %c0_i32, %c0_i32_0, %c0_i32_1 : i32, i32, i32, i32
  }
}

</mosaic_0001>

<llo_original>
// kernel: bottleneck_forward.2
$region0: #{bottleneck_forward.2}
  #allocation0 [shape = 'u32[]', space=smem, size = 0x4, offset = 0x4, fixed_abs, tag = 'smem constant byte address 0x4 - core index']
  #allocation1 [shape = 'u32[72,128]{1,0:T(1,128)}', space=vmem, size = 0x9000, scoped, tag = 'internal scratch']
  %s0 = inlined_call_operand.vmem [shape: bf16[512,64], index: 0, kind: input, shape index: {}]
  %s1 = inlined_call_operand.vmem [shape: bf16[64,128], index: 1, kind: input, shape index: {}]
  %s2 = inlined_call_operand.vmem [shape: f32[1,128], index: 2, kind: input, shape index: {}]
  %s3 = inlined_call_operand.vmem [shape: f32[1,128], index: 3, kind: input, shape index: {}]
  %s4 = inlined_call_operand.vmem [shape: bf16[512,128], index: 4, kind: output, shape index: {}]
  %s5 = sld [smem:[#allocation0]]
  $region49: #{bottleneck_forward.2} parent=0
    _
  %s7 = ssub.s32 1, %s5
  %s8 = scalar_select 0, %s7, %s5
  loop: start=0, step=1, limit=4
  $region2: #{bottleneck_forward.2} parent=0 // loop_pre_header
    _
  $region3: #{bottleneck_forward.2} parent=0 // loop_header
    %s10 = sphi 0, %s14
    %p11 = scmp.ge.s32.totalorder %s10, 4
    %s20 = sphi 0, %s22
    %s23 = sphi 0, %s20
    %s24 = sphi 0, %s23
    %s40 = sphi 0, %s24
    %s44 = sphi 0, %s44
    %s46 = sphi 0, %s44
    %s47 = sphi 0, %s46
    %s61 = sphi 0, %s47
    %s65 = sphi 0, %s65
    %s67 = sphi 0, %s65
    %s68 = sphi 0, %s67
    %s82 = sphi 0, %s68
    %s86 = sphi 0, %s86
    %s88 = sphi 0, %s86
    %s89 = sphi 0, %s88
    %s103 = sphi 0, %s89
    %s109 = sphi 0, %s111
    %s112 = sphi 0, %s109
    %s113 = sphi 0, %s112
    %s129 = sphi 0, %s113
  $region4: #{bottleneck_forward.2} parent=0 // loop_header_branch
    %13 = sbr.rel (%p11) target = $region8
  $region5: #{bottleneck_forward.2} parent=0 // loop_body
    %s15 = ssub.s32 %s10, 1
    %s16 = ssub.s32 %s10, 2
    %s17 = sadd.s32 %s10, 1
    %s18 = ssub.s32 %s10, %s17
    %p19 = scmp.eq.s32.totalorder %s18, 0
    %s21 = sadd.s32 %s20, 1
    %s22 = scalar_select %p19, %s20, %s21
    %p25 = pneg %p19
    %p26 = scmp.eq.s32.totalorder %s10, 1
    %p27 = por %p25, %p26
    %p28 = scmp.ne.s32.totalorder %s20, %s23
    %p29 = scmp.eq.s32.totalorder %s10, 0
    %p30 = por %p28, %p29
    %p31 = scmp.ne.s32.totalorder %s20, %s23
    %p32 = scmp.eq.s32.totalorder %s15, 1
    %p33 = por %p31, %p32
    %p34 = scmp.ne.s32.totalorder %s23, %s24
    %p35 = scmp.eq.s32.totalorder %s15, 0
    %p36 = por %p34, %p35
    %p37 = scmp.ne.s32.totalorder %s23, %s24
    %p38 = scmp.eq.s32.totalorder %s16, 1
    %p39 = por %p37, %p38
    %p41 = scmp.ne.s32.totalorder %s24, %s40
    %p42 = scmp.eq.s32.totalorder %s16, 0
    %p43 = por %p41, %p42
    %s45 = sadd.s32 %s44, 1
    %p48 = scmp.eq.s32.totalorder %s10, 1
    %p49 = scmp.ne.s32.totalorder %s44, %s46
    %p50 = scmp.eq.s32.totalorder %s10, 0
    %p51 = por %p49, %p50
    %p52 = scmp.ne.s32.totalorder %s44, %s46
    %p53 = scmp.eq.s32.totalorder %s15, 1
    %p54 = por %p52, %p53
    %p55 = scmp.ne.s32.totalorder %s46, %s47
    %p56 = scmp.eq.s32.totalorder %s15, 0
    %p57 = por %p55, %p56
    %p58 = scmp.ne.s32.totalorder %s46, %s47
    %p59 = scmp.eq.s32.totalorder %s16, 1
    %p60 = por %p58, %p59
    %p62 = scmp.ne.s32.totalorder %s47, %s61
    %p63 = scmp.eq.s32.totalorder %s16, 0
    %p64 = por %p62, %p63
    %s66 = sadd.s32 %s65, 1
    %p69 = scmp.eq.s32.totalorder %s10, 1
    %p70 = scmp.ne.s32.totalorder %s65, %s67
    %p71 = scmp.eq.s32.totalorder %s10, 0
    %p72 = por %p70, %p71
    %p73 = scmp.ne.s32.totalorder %s65, %s67
    %p74 = scmp.eq.s32.totalorder %s15, 1
    %p75 = por %p73, %p74
    %p76 = scmp.ne.s32.totalorder %s67, %s68
    %p77 = scmp.eq.s32.totalorder %s15, 0
    %p78 = por %p76, %p77
    %p79 = scmp.ne.s32.totalorder %s67, %s68
    %p80 = scmp.eq.s32.totalorder %s16, 1
    %p81 = por %p79, %p80
    %p83 = scmp.ne.s32.totalorder %s68, %s82
    %p84 = scmp.eq.s32.totalorder %s16, 0
    %p85 = por %p83, %p84
    %s87 = sadd.s32 %s86, 1
    %p90 = scmp.eq.s32.totalorder %s10, 1
    %p91 = scmp.ne.s32.totalorder %s86, %s88
    %p92 = scmp.eq.s32.totalorder %s10, 0
    %p93 = por %p91, %p92
    %p94 = scmp.ne.s32.totalorder %s86, %s88
    %p95 = scmp.eq.s32.totalorder %s15, 1
    %p96 = por %p94, %p95
    %p97 = scmp.ne.s32.totalorder %s88, %s89
    %p98 = scmp.eq.s32.totalorder %s15, 0
    %p99 = por %p97, %p98
    %p100 = scmp.ne.s32.totalorder %s88, %s89
    %p101 = scmp.eq.s32.totalorder %s16, 1
    %p102 = por %p100, %p101
    %p104 = scmp.ne.s32.totalorder %s89, %s103
    %p105 = scmp.eq.s32.totalorder %s16, 0
    %p106 = por %p104, %p105
    %s107 = ssub.s32 %s10, %s17
    %p108 = scmp.eq.s32.totalorder %s107, 0
    %s110 = sadd.s32 %s109, 1
    %s111 = scalar_select %p108, %s109, %s110
    %p114 = pneg %p108
    %p115 = scmp.eq.s32.totalorder %s10, 1
    %p116 = por %p114, %p115
    %p117 = scmp.ne.s32.totalorder %s109, %s112
    %p118 = scmp.eq.s32.totalorder %s10, 0
    %p119 = por %p117, %p118
    %p120 = scmp.ne.s32.totalorder %s109, %s112
    %p121 = scmp.eq.s32.totalorder %s15, 1
    %p122 = por %p120, %p121
    %p123 = scmp.ne.s32.totalorder %s112, %s113
    %p124 = scmp.eq.s32.totalorder %s15, 0
    %p125 = por %p123, %p124
    %p126 = scmp.ne.s32.totalorder %s112, %s113
    %p127 = scmp.eq.s32.totalorder %s16, 1
    %p128 = por %p126, %p127
    %p130 = scmp.ne.s32.totalorder %s113, %s129
    %p131 = scmp.eq.s32.totalorder %s16, 0
    %p132 = por %p130, %p131
    %p133 = scmp.le.s32.totalorder 1, %s10
    %p134 = scmp.lt.s32.totalorder %s10, 3
    %p135 = pnand %p133, %p134
    %p136 = pneg %p135
    // Predicated region
    $region9: #{bottleneck_forward.2} parent=5 // pred_check
      _
    $region10: #{bottleneck_forward.2} parent=5 // pred_check_branch
      %138 = sbr.rel (%p135) target = $region12
    $region11: #{bottleneck_forward.2} parent=5 // pred_region
      %s139 = ssub.s32 %s10, 1
      // Predicated region
      $region13: #{bottleneck_forward.2} parent=11 // pred_check
        %p140 = pneg %p57
      $region14: #{bottleneck_forward.2} parent=11 // pred_check_branch
        %142 = sbr.rel (%p140) target = $region16
      $region15: #{bottleneck_forward.2} parent=11 // pred_region
        _
      $region16: #{bottleneck_forward.2} parent=11 // pred_fallthru
        _
      // Predicated region
      $region17: #{bottleneck_forward.2} parent=11 // pred_check
        %p143 = pneg %p78
      $region18: #{bottleneck_forward.2} parent=11 // pred_check_branch
        %145 = sbr.rel (%p143) target = $region20
      $region19: #{bottleneck_forward.2} parent=11 // pred_region
        _
      $region20: #{bottleneck_forward.2} parent=11 // pred_fallthru
        _
      // Predicated region
      $region21: #{bottleneck_forward.2} parent=11 // pred_check
        %p146 = pneg %p99
      $region22: #{bottleneck_forward.2} parent=11 // pred_check_branch
        %148 = sbr.rel (%p146) target = $region24
      $region23: #{bottleneck_forward.2} parent=11 // pred_region
        _
      $region24: #{bottleneck_forward.2} parent=11 // pred_fallthru
        _
    $region12: #{bottleneck_forward.2} parent=5 // pred_fallthru
      _
    %p149 = scmp.lt.s32.totalorder %s10, 2
    // Predicated region
    $region25: #{bottleneck_forward.2} parent=5 // pred_check
      %p150 = pneg %p149
    $region26: #{bottleneck_forward.2} parent=5 // pred_check_branch
      %152 = sbr.rel (%p150) target = $region28
    $region27: #{bottleneck_forward.2} parent=5 // pred_region
      // Predicated region
      $region29: #{bottleneck_forward.2} parent=27 // pred_check
        %p153 = pneg %p30
      $region30: #{bottleneck_forward.2} parent=27 // pred_check_branch
        %155 = sbr.rel (%p153) target = $region32
      $region31: #{bottleneck_forward.2} parent=27 // pred_region
        %s156 = smul.u32 32, %s10
        %p157 = scmp.lt.s32.totalorder %s156, 63
        %s158 = scalar_select %p157, %s156, 63
        %s159 = smul.addr %s158, 4
        %s160 = scalar_lea.vmem %s0, %s159
        %s161 = smul.u32 32, %s10
      $region32: #{bottleneck_forward.2} parent=27 // pred_fallthru
        _
    $region28: #{bottleneck_forward.2} parent=5 // pred_fallthru
      _
    %p162 = scmp.le.s32.totalorder 1, %s10
    %p163 = scmp.lt.s32.totalorder %s10, 3
    %p164 = pnand %p162, %p163
    %p165 = pneg %p164
    // Predicated region
    $region33: #{bottleneck_forward.2} parent=5 // pred_check
      _
    $region34: #{bottleneck_forward.2} parent=5 // pred_check_branch
      %167 = sbr.rel (%p164) target = $region36
    $region35: #{bottleneck_forward.2} parent=5 // pred_region
      %s168 = ssub.s32 %s10, 1
      %s169 = smul.u32 32, %s15
      %p170 = scmp.lt.s32.totalorder %s169, 63
      %s171 = scalar_select %p170, %s169, 63
      %s172 = smul.addr %s171, 4
      %s173 = scalar_lea.vmem %s0, %s172
      %p174 = pneg %p36
      %p175 = pneg %p33
      %p176 = pneg %p57
      %p177 = pneg %p54
      %p178 = pneg %p78
      %p179 = pneg %p75
      %p180 = pneg %p99
      %p181 = pneg %p96
      %p182 = pneg %p125
      %p183 = pneg %p122
      %s184 = smul.u32 32, %s15
      %p185 = scmp.lt.s32.totalorder %s184, 63
      %s186 = scalar_select %p185, %s184, 63
      %s187 = smul.addr %s186, 4
      %s188 = scalar_lea.vmem %s4, %s187
      %s189 = smul.u32 32, %s15
      %p190 = scmp.lt.s32.totalorder %s189, 63
      %s191 = scalar_select %p190, %s189, 63
      %s192 = smul.addr %s191, 4
      %s193 = scalar_lea.vmem %s0, %s192
      %s194 = smul.u32 32, %s15
      %s195 = smul.u32 32, %s15
      %p196 = scmp.lt.s32.totalorder %s195, 63
      %s197 = scalar_select %p196, %s195, 63
      %s198 = smul.addr %s197, 4
      %s199 = scalar_lea.vmem %s4, %s198
      %s200 = smul.u32 32, %s15
      %v202 = vld [vmem:[%s193] sm:$0xf]
      %v203 = vld [vmem:[%s193 + $0x4] sm:$0xf]
      %v204 = vld [vmem:[%s193 + $0x8] sm:$0xf]
      %v205 = vld [vmem:[%s193 + $0xc] sm:$0xf]
      %v206 = vld [vmem:[%s193 + $0x10] sm:$0xf]
      %v207 = vld [vmem:[%s193 + $0x14] sm:$0xf]
      %v208 = vld [vmem:[%s193 + $0x18] sm:$0xf]
      %v209 = vld [vmem:[%s193 + $0x1c] sm:$0xf]
      %v210 = vld [vmem:[%s193 + $0x20] sm:$0xf]
      %v211 = vld [vmem:[%s193 + $0x24] sm:$0xf]
      %v212 = vld [vmem:[%s193 + $0x28] sm:$0xf]
      %v213 = vld [vmem:[%s193 + $0x2c] sm:$0xf]
      %v214 = vld [vmem:[%s193 + $0x30] sm:$0xf]
      %v215 = vld [vmem:[%s193 + $0x34] sm:$0xf]
      %v216 = vld [vmem:[%s193 + $0x38] sm:$0xf]
      %v217 = vld [vmem:[%s193 + $0x3c] sm:$0xf]
      %v218 = vld [vmem:[%s193 + $0x40] sm:$0xf]
      %v219 = vld [vmem:[%s193 + $0x44] sm:$0xf]
      %v220 = vld [vmem:[%s193 + $0x48] sm:$0xf]
      %v221 = vld [vmem:[%s193 + $0x4c] sm:$0xf]
      %v222 = vld [vmem:[%s193 + $0x50] sm:$0xf]
      %v223 = vld [vmem:[%s193 + $0x54] sm:$0xf]
      %v224 = vld [vmem:[%s193 + $0x58] sm:$0xf]
      %v225 = vld [vmem:[%s193 + $0x5c] sm:$0xf]
      %v226 = vld [vmem:[%s193 + $0x60] sm:$0xf]
      %v227 = vld [vmem:[%s193 + $0x64] sm:$0xf]
      %v228 = vld [vmem:[%s193 + $0x68] sm:$0xf]
      %v229 = vld [vmem:[%s193 + $0x6c] sm:$0xf]
      %v230 = vld [vmem:[%s193 + $0x70] sm:$0xf]
      %v231 = vld [vmem:[%s193 + $0x74] sm:$0xf]
      %v232 = vld [vmem:[%s193 + $0x78] sm:$0xf]
      %v233 = vld [vmem:[%s193 + $0x7c] sm:$0xf]
      %v234 = vld [vmem:[%s1] sm:$0xf]
      %v235 = vld [vmem:[%s1 + $0x4] sm:$0xf]
      %v236 = vld [vmem:[%s1 + $0x8] sm:$0xf]
      %v237 = vld [vmem:[%s1 + $0xc] sm:$0xf]
      %v238 = vld [vmem:[%s1 + $0x10] sm:$0xf]
      %v239 = vld [vmem:[%s1 + $0x14] sm:$0xf]
      %v240 = vld [vmem:[%s1 + $0x18] sm:$0xf]
      %v241 = vld [vmem:[%s1 + $0x1c] sm:$0xf]
      %v274 = vunpack.c.l.b16 %v202
      %v275 = vunpack.c.l.b16 %v203
      %v276 = vunpack.c.l.b16 %v204
      %v277 = vunpack.c.l.b16 %v205
      %v278 = vunpack.c.l.b16 %v206
      %v279 = vunpack.c.l.b16 %v207
      %v280 = vunpack.c.l.b16 %v208
      %v281 = vunpack.c.l.b16 %v209
      %v282 = vunpack.c.l.b16 %v210
      %v283 = vunpack.c.l.b16 %v211
      %v284 = vunpack.c.l.b16 %v212
      %v285 = vunpack.c.l.b16 %v213
      %v286 = vunpack.c.l.b16 %v214
      %v287 = vunpack.c.l.b16 %v215
      %v288 = vunpack.c.l.b16 %v216
      %v289 = vunpack.c.l.b16 %v217
      %v290 = vunpack.c.l.b16 %v218
      %v291 = vunpack.c.l.b16 %v219
      %v292 = vunpack.c.l.b16 %v220
      %v293 = vunpack.c.l.b16 %v221
      %v294 = vunpack.c.l.b16 %v222
      %v295 = vunpack.c.l.b16 %v223
      %v296 = vunpack.c.l.b16 %v224
      %v297 = vunpack.c.l.b16 %v225
      %v298 = vunpack.c.l.b16 %v226
      %v299 = vunpack.c.l.b16 %v227
      %v300 = vunpack.c.l.b16 %v228
      %v301 = vunpack.c.l.b16 %v229
      %v302 = vunpack.c.l.b16 %v230
      %v303 = vunpack.c.l.b16 %v231
      %v304 = vunpack.c.l.b16 %v232
      %v305 = vunpack.c.l.b16 %v233
      %v306 = vpack.c.b16 %v275, %v274
      %v307 = vpack.c.b16 %v277, %v276
      %v308 = vpack.c.b16 %v279, %v278
      %v309 = vpack.c.b16 %v281, %v280
      %v310 = vpack.c.b16 %v283, %v282
      %v311 = vpack.c.b16 %v285, %v284
      %v312 = vpack.c.b16 %v287, %v286
      %v313 = vpack.c.b16 %v289, %v288
      %v314 = vpack.c.b16 %v291, %v290
      %v315 = vpack.c.b16 %v293, %v292
      %v316 = vpack.c.b16 %v295, %v294
      %v317 = vpack.c.b16 %v297, %v296
      %v318 = vpack.c.b16 %v299, %v298
      %v319 = vpack.c.b16 %v301, %v300
      %v320 = vpack.c.b16 %v303, %v302
      %v321 = vpack.c.b16 %v305, %v304
      %v330 = vunpack.c.l.b16 %v234
      %v331 = vunpack.c.l.b16 %v235
      %v332 = vunpack.c.l.b16 %v236
      %v333 = vunpack.c.l.b16 %v237
      %v334 = vunpack.c.l.b16 %v238
      %v335 = vunpack.c.l.b16 %v239
      %v336 = vunpack.c.l.b16 %v240
      %v337 = vunpack.c.l.b16 %v241
      %v338 = vpack.c.b16 %v331, %v330
      %v339 = vpack.c.b16 %v333, %v332
      %v340 = vpack.c.b16 %v335, %v334
      %v341 = vpack.c.b16 %v337, %v336
      %vm346 = vcmask 523264
      %v348 = vsel %vm346, %v306, 0
      %v351 = vsel %vm346, %v307, 0
      %v354 = vsel %vm346, %v308, 0
      %v357 = vsel %vm346, %v309, 0
      %v360 = vsel %vm346, %v310, 0
      %v363 = vsel %vm346, %v311, 0
      %v366 = vsel %vm346, %v312, 0
      %v369 = vsel %vm346, %v313, 0
      %v372 = vsel %vm346, %v314, 0
      %v375 = vsel %vm346, %v315, 0
      %v378 = vsel %vm346, %v316, 0
      %v381 = vsel %vm346, %v317, 0
      %v384 = vsel %vm346, %v318, 0
      %v387 = vsel %vm346, %v319, 0
      %v390 = vsel %vm346, %v320, 0
      %v393 = vsel %vm346, %v321, 0
      %395 = vmatpush.bf16.msra.mxu0 0
      %396 = vmatpush.bf16.msra.mxu0 0
      %397 = vmatpush.bf16.msra.mxu0 0
      %398 = vmatpush.bf16.msra.mxu0 0
      %399 = vmatpush.bf16.msra.mxu0 %v341
      %400 = vmatpush.bf16.msra.mxu0 %v340
      %401 = vmatpush.bf16.msra.mxu0 %v339
      %402 = vmatpush.bf16.msra.mxu0 %v338
      %403 = vmatmul.bf16.gmra.mxu0 %v348
      %v404 = vpop.f32.mrf.mxu0
      %v405 = vadd.f32 0.0, %v404
      %v406 = vpop.f32.mrf.mxu0
      %v407 = vadd.f32 0.0, %v406
      %408 = vmatmul.bf16.gmra.mxu0 %v351
      %v409 = vpop.f32.mrf.mxu0
      %v410 = vadd.f32 0.0, %v409
      %v411 = vpop.f32.mrf.mxu0
      %v412 = vadd.f32 0.0, %v411
      %413 = vmatmul.bf16.gmra.mxu0 %v354
      %v414 = vpop.f32.mrf.mxu0
      %v415 = vadd.f32 0.0, %v414
      %v416 = vpop.f32.mrf.mxu0
      %v417 = vadd.f32 0.0, %v416
      %418 = vmatmul.bf16.gmra.mxu0 %v357
      %v419 = vpop.f32.mrf.mxu0
      %v420 = vadd.f32 0.0, %v419
      %v421 = vpop.f32.mrf.mxu0
      %v422 = vadd.f32 0.0, %v421
      %423 = vmatmul.bf16.gmra.mxu0 %v360
      %v424 = vpop.f32.mrf.mxu0
      %v425 = vadd.f32 0.0, %v424
      %v426 = vpop.f32.mrf.mxu0
      %v427 = vadd.f32 0.0, %v426
      %428 = vmatmul.bf16.gmra.mxu0 %v363
      %v429 = vpop.f32.mrf.mxu0
      %v430 = vadd.f32 0.0, %v429
      %v431 = vpop.f32.mrf.mxu0
      %v432 = vadd.f32 0.0, %v431
      %433 = vmatmul.bf16.gmra.mxu0 %v366
      %v434 = vpop.f32.mrf.mxu0
      %v435 = vadd.f32 0.0, %v434
      %v436 = vpop.f32.mrf.mxu0
      %v437 = vadd.f32 0.0, %v436
      %438 = vmatmul.bf16.gmra.mxu0 %v369
      %v439 = vpop.f32.mrf.mxu0
      %v440 = vadd.f32 0.0, %v439
      %v441 = vpop.f32.mrf.mxu0
      %v442 = vadd.f32 0.0, %v441
      %443 = vmatmul.bf16.gmra.mxu0 %v372
      %v444 = vpop.f32.mrf.mxu0
      %v445 = vadd.f32 0.0, %v444
      %v446 = vpop.f32.mrf.mxu0
      %v447 = vadd.f32 0.0, %v446
      %448 = vmatmul.bf16.gmra.mxu0 %v375
      %v449 = vpop.f32.mrf.mxu0
      %v450 = vadd.f32 0.0, %v449
      %v451 = vpop.f32.mrf.mxu0
      %v452 = vadd.f32 0.0, %v451
      %453 = vmatmul.bf16.gmra.mxu0 %v378
      %v454 = vpop.f32.mrf.mxu0
      %v455 = vadd.f32 0.0, %v454
      %v456 = vpop.f32.mrf.mxu0
      %v457 = vadd.f32 0.0, %v456
      %458 = vmatmul.bf16.gmra.mxu0 %v381
      %v459 = vpop.f32.mrf.mxu0
      %v460 = vadd.f32 0.0, %v459
      %v461 = vpop.f32.mrf.mxu0
      %v462 = vadd.f32 0.0, %v461
      %463 = vmatmul.bf16.gmra.mxu0 %v384
      %v464 = vpop.f32.mrf.mxu0
      %v465 = vadd.f32 0.0, %v464
      %v466 = vpop.f32.mrf.mxu0
      %v467 = vadd.f32 0.0, %v466
      %468 = vmatmul.bf16.gmra.mxu0 %v387
      %v469 = vpop.f32.mrf.mxu0
      %v470 = vadd.f32 0.0, %v469
      %v471 = vpop.f32.mrf.mxu0
      %v472 = vadd.f32 0.0, %v471
      %473 = vmatmul.bf16.gmra.mxu0 %v390
      %v474 = vpop.f32.mrf.mxu0
      %v475 = vadd.f32 0.0, %v474
      %v476 = vpop.f32.mrf.mxu0
      %v477 = vadd.f32 0.0, %v476
      %478 = vmatmul.bf16.gmra.mxu0 %v393
      %v479 = vpop.f32.mrf.mxu0
      %v480 = vadd.f32 0.0, %v479
      %v481 = vpop.f32.mrf.mxu0
      %v482 = vadd.f32 0.0, %v481
      %483 = vdwg.mxu0
      %v484 = vld [vmem:[%s2] sm:$0x1]
      %v486 = vperm.slane %v484, 0
      %v488 = vmul.f32 %v405, %v486
      %v489 = vmul.f32 %v407, %v486
      %v490 = vmul.f32 %v410, %v486
      %v491 = vmul.f32 %v412, %v486
      %v492 = vmul.f32 %v415, %v486
      %v493 = vmul.f32 %v417, %v486
      %v494 = vmul.f32 %v420, %v486
      %v495 = vmul.f32 %v422, %v486
      %v496 = vmul.f32 %v425, %v486
      %v497 = vmul.f32 %v427, %v486
      %v498 = vmul.f32 %v430, %v486
      %v499 = vmul.f32 %v432, %v486
      %v500 = vmul.f32 %v435, %v486
      %v501 = vmul.f32 %v437, %v486
      %v502 = vmul.f32 %v440, %v486
      %v503 = vmul.f32 %v442, %v486
      %v504 = vmul.f32 %v445, %v486
      %v505 = vmul.f32 %v447, %v486
      %v506 = vmul.f32 %v450, %v486
      %v507 = vmul.f32 %v452, %v486
      %v508 = vmul.f32 %v455, %v486
      %v509 = vmul.f32 %v457, %v486
      %v510 = vmul.f32 %v460, %v486
      %v511 = vmul.f32 %v462, %v486
      %v512 = vmul.f32 %v465, %v486
      %v513 = vmul.f32 %v467, %v486
      %v514 = vmul.f32 %v470, %v486
      %v515 = vmul.f32 %v472, %v486
      %v516 = vmul.f32 %v475, %v486
      %v517 = vmul.f32 %v477, %v486
      %v518 = vmul.f32 %v480, %v486
      %v519 = vmul.f32 %v482, %v486
      %v520 = vld [vmem:[%s3] sm:$0x1]
      %v522 = vperm.slane %v520, 0
      %v524 = vadd.f32 %v488, %v522
      %v525 = vadd.f32 %v489, %v522
      %v526 = vadd.f32 %v490, %v522
      %v527 = vadd.f32 %v491, %v522
      %v528 = vadd.f32 %v492, %v522
      %v529 = vadd.f32 %v493, %v522
      %v530 = vadd.f32 %v494, %v522
      %v531 = vadd.f32 %v495, %v522
      %v532 = vadd.f32 %v496, %v522
      %v533 = vadd.f32 %v497, %v522
      %v534 = vadd.f32 %v498, %v522
      %v535 = vadd.f32 %v499, %v522
      %v536 = vadd.f32 %v500, %v522
      %v537 = vadd.f32 %v501, %v522
      %v538 = vadd.f32 %v502, %v522
      %v539 = vadd.f32 %v503, %v522
      %v540 = vadd.f32 %v504, %v522
      %v541 = vadd.f32 %v505, %v522
      %v542 = vadd.f32 %v506, %v522
      %v543 = vadd.f32 %v507, %v522
      %v544 = vadd.f32 %v508, %v522
      %v545 = vadd.f32 %v509, %v522
      %v546 = vadd.f32 %v510, %v522
      %v547 = vadd.f32 %v511, %v522
      %v548 = vadd.f32 %v512, %v522
      %v549 = vadd.f32 %v513, %v522
      %v550 = vadd.f32 %v514, %v522
      %v551 = vadd.f32 %v515, %v522
      %v552 = vadd.f32 %v516, %v522
      %v553 = vadd.f32 %v517, %v522
      %v554 = vadd.f32 %v518, %v522
      %v555 = vadd.f32 %v519, %v522
      %v556 = vmax.f32 %v524, 0.0
      %v557 = vmax.f32 %v525, 0.0
      %v558 = vmax.f32 %v526, 0.0
      %v559 = vmax.f32 %v527, 0.0
      %v560 = vmax.f32 %v528, 0.0
      %v561 = vmax.f32 %v529, 0.0
      %v562 = vmax.f32 %v530, 0.0
      %v563 = vmax.f32 %v531, 0.0
      %v564 = vmax.f32 %v532, 0.0
      %v565 = vmax.f32 %v533, 0.0
      %v566 = vmax.f32 %v534, 0.0
      %v567 = vmax.f32 %v535, 0.0
      %v568 = vmax.f32 %v536, 0.0
      %v569 = vmax.f32 %v537, 0.0
      %v570 = vmax.f32 %v538, 0.0
      %v571 = vmax.f32 %v539, 0.0
      %v572 = vmax.f32 %v540, 0.0
      %v573 = vmax.f32 %v541, 0.0
      %v574 = vmax.f32 %v542, 0.0
      %v575 = vmax.f32 %v543, 0.0
      %v576 = vmax.f32 %v544, 0.0
      %v577 = vmax.f32 %v545, 0.0
      %v578 = vmax.f32 %v546, 0.0
      %v579 = vmax.f32 %v547, 0.0
      %v580 = vmax.f32 %v548, 0.0
      %v581 = vmax.f32 %v549, 0.0
      %v582 = vmax.f32 %v550, 0.0
      %v583 = vmax.f32 %v551, 0.0
      %v584 = vmax.f32 %v552, 0.0
      %v585 = vmax.f32 %v553, 0.0
      %v586 = vmax.f32 %v554, 0.0
      %v587 = vmax.f32 %v555, 0.0
      %v588 = vpack.c.bf16 %v556, %v556
      %v589 = vpack.c.bf16 %v557, %v557
      %v590 = vpack.c.bf16 %v558, %v558
      %v591 = vpack.c.bf16 %v559, %v559
      %v592 = vpack.c.bf16 %v560, %v560
      %v593 = vpack.c.bf16 %v561, %v561
      %v594 = vpack.c.bf16 %v562, %v562
      %v595 = vpack.c.bf16 %v563, %v563
      %v596 = vpack.c.bf16 %v564, %v564
      %v597 = vpack.c.bf16 %v565, %v565
      %v598 = vpack.c.bf16 %v566, %v566
      %v599 = vpack.c.bf16 %v567, %v567
      %v600 = vpack.c.bf16 %v568, %v568
      %v601 = vpack.c.bf16 %v569, %v569
      %v602 = vpack.c.bf16 %v570, %v570
      %v603 = vpack.c.bf16 %v571, %v571
      %v604 = vpack.c.bf16 %v572, %v572
      %v605 = vpack.c.bf16 %v573, %v573
      %v606 = vpack.c.bf16 %v574, %v574
      %v607 = vpack.c.bf16 %v575, %v575
      %v608 = vpack.c.bf16 %v576, %v576
      %v609 = vpack.c.bf16 %v577, %v577
      %v610 = vpack.c.bf16 %v578, %v578
      %v611 = vpack.c.bf16 %v579, %v579
      %v612 = vpack.c.bf16 %v580, %v580
      %v613 = vpack.c.bf16 %v581, %v581
      %v614 = vpack.c.bf16 %v582, %v582
      %v615 = vpack.c.bf16 %v583, %v583
      %v616 = vpack.c.bf16 %v584, %v584
      %v617 = vpack.c.bf16 %v585, %v585
      %v618 = vpack.c.bf16 %v586, %v586
      %v619 = vpack.c.bf16 %v587, %v587
      %620 = vst [vmem:[%s199] sm:$0xf] %v588
      %621 = vst [vmem:[%s199 + $0x4] sm:$0xf] %v589
      %622 = vst [vmem:[%s199 + $0x8] sm:$0xf] %v590
      %623 = vst [vmem:[%s199 + $0xc] sm:$0xf] %v591
      %624 = vst [vmem:[%s199 + $0x10] sm:$0xf] %v592
      %625 = vst [vmem:[%s199 + $0x14] sm:$0xf] %v593
      %626 = vst [vmem:[%s199 + $0x18] sm:$0xf] %v594
      %627 = vst [vmem:[%s199 + $0x1c] sm:$0xf] %v595
      %628 = vst [vmem:[%s199 + $0x20] sm:$0xf] %v596
      %629 = vst [vmem:[%s199 + $0x24] sm:$0xf] %v597
      %630 = vst [vmem:[%s199 + $0x28] sm:$0xf] %v598
      %631 = vst [vmem:[%s199 + $0x2c] sm:$0xf] %v599
      %632 = vst [vmem:[%s199 + $0x30] sm:$0xf] %v600
      %633 = vst [vmem:[%s199 + $0x34] sm:$0xf] %v601
      %634 = vst [vmem:[%s199 + $0x38] sm:$0xf] %v602
      %635 = vst [vmem:[%s199 + $0x3c] sm:$0xf] %v603
      %636 = vst [vmem:[%s199 + $0x40] sm:$0xf] %v604
      %637 = vst [vmem:[%s199 + $0x44] sm:$0xf] %v605
      %638 = vst [vmem:[%s199 + $0x48] sm:$0xf] %v606
      %639 = vst [vmem:[%s199 + $0x4c] sm:$0xf] %v607
      %640 = vst [vmem:[%s199 + $0x50] sm:$0xf] %v608
      %641 = vst [vmem:[%s199 + $0x54] sm:$0xf] %v609
      %642 = vst [vmem:[%s199 + $0x58] sm:$0xf] %v610
      %643 = vst [vmem:[%s199 + $0x5c] sm:$0xf] %v611
      %644 = vst [vmem:[%s199 + $0x60] sm:$0xf] %v612
      %645 = vst [vmem:[%s199 + $0x64] sm:$0xf] %v613
      %646 = vst [vmem:[%s199 + $0x68] sm:$0xf] %v614
      %647 = vst [vmem:[%s199 + $0x6c] sm:$0xf] %v615
      %648 = vst [vmem:[%s199 + $0x70] sm:$0xf] %v616
      %649 = vst [vmem:[%s199 + $0x74] sm:$0xf] %v617
      %650 = vst [vmem:[%s199 + $0x78] sm:$0xf] %v618
      %651 = vst [vmem:[%s199 + $0x7c] sm:$0xf] %v619
      %s652 = smul.u32 32, %s15
      %p653 = scmp.lt.s32.totalorder %s652, 63
      %s654 = scalar_select %p653, %s652, 63
      %s655 = smul.addr %s654, 4
      %s656 = scalar_lea.vmem %s4, %s655
      // Predicated region
      $region37: #{bottleneck_forward.2} parent=35 // pred_check
        %p657 = pneg %p122
      $region38: #{bottleneck_forward.2} parent=35 // pred_check_branch
        %659 = sbr.rel (%p657) target = $region40
      $region39: #{bottleneck_forward.2} parent=35 // pred_region
        %s660 = smul.u32 32, %s15
      $region40: #{bottleneck_forward.2} parent=35 // pred_fallthru
        _
    $region36: #{bottleneck_forward.2} parent=5 // pred_fallthru
      _
    %p661 = scmp.le.s32.totalorder 2, %s10
    // Predicated region
    $region41: #{bottleneck_forward.2} parent=5 // pred_check
      %p662 = pneg %p661
    $region42: #{bottleneck_forward.2} parent=5 // pred_check_branch
      %664 = sbr.rel (%p662) target = $region44
    $region43: #{bottleneck_forward.2} parent=5 // pred_region
      %s665 = ssub.s32 %s10, 2
      // Predicated region
      $region45: #{bottleneck_forward.2} parent=43 // pred_check
        %p666 = pneg %p128
      $region46: #{bottleneck_forward.2} parent=43 // pred_check_branch
        %668 = sbr.rel (%p666) target = $region48
      $region47: #{bottleneck_forward.2} parent=43 // pred_region
        %s669 = smul.u32 32, %s16
        %p670 = scmp.lt.s32.totalorder %s669, 63
        %s671 = scalar_select %p670, %s669, 63
        %s672 = smul.addr %s671, 4
        %s673 = scalar_lea.vmem %s4, %s672
      $region48: #{bottleneck_forward.2} parent=43 // pred_fallthru
        _
    $region44: #{bottleneck_forward.2} parent=5 // pred_fallthru
      _
  $region6: #{bottleneck_forward.2} parent=0 // loop_footer
    %s14 = sadd.s32 1, %s10
  $region7: #{bottleneck_forward.2} parent=0 // loop_footer_branch
    %9 = sbr.rel target = $region3
  $region8: #{bottleneck_forward.2} parent=0 // loop_exit
    _

// kernel: bottleneck_forward.3
$region0: #{bottleneck_forward.3}
  #allocation0 [shape = 'u32[]', space=smem, size = 0x4, offset = 0x4, fixed_abs, tag = 'smem constant byte address 0x4 - core index']
  #allocation1 [shape = 'u32[72,128]{1,0:T(1,128)}', space=vmem, size = 0x9000, scoped, tag = 'internal scratch']
  %s0 = inlined_call_operand.vmem [shape: f32[2,9,9,128], index: 0, kind: input, shape index: {}]
  %s1 = inlined_call_operand.vmem [shape: f32[2,9,9,128], index: 1, kind: input, shape index: {}]
  %s2 = inlined_call_operand.vmem [shape: f32[2,9,9,128], index: 2, kind: input, shape index: {}]
  %s3 = inlined_call_operand.vmem [shape: f32[2,9,9,128], index: 3, kind: input, shape index: {}]
  %s4 = inlined_call_operand.vmem [shape: bf16[9,128,128], index: 4, kind: input, shape index: {}]
  %s5 = inlined_call_operand.vmem [shape: f32[1,128], index: 5, kind: input, shape index: {}]
  %s6 = inlined_call_operand.vmem [shape: f32[1,128], index: 6, kind: input, shape index: {}]
  %s7 = inlined_call_operand.vmem [shape: bf16[128,128], index: 7, kind: input, shape index: {}]
  %s8 = inlined_call_operand.vmem [shape: f32[1,128], index: 8, kind: input, shape index: {}]
  %s9 = inlined_call_operand.vmem [shape: f32[1,128], index: 9, kind: input, shape index: {}]
  %s10 = inlined_call_operand.vmem [shape: bf16[2,8,8,64], index: 10, kind: input, shape index: {}]
  %s11 = inlined_call_operand.vmem [shape: bf16[64,128], index: 11, kind: input, shape index: {}]
  %s12 = inlined_call_operand.vmem [shape: f32[1,128], index: 12, kind: input, shape index: {}]
  %s13 = inlined_call_operand.vmem [shape: f32[1,128], index: 13, kind: input, shape index: {}]
  %s14 = inlined_call_operand.hbm [shape: f32[2,8,8,128], index: 14, kind: output, shape index: {}]
  %s15 = sld [smem:[#allocation0]]
  $region89: #{bottleneck_forward.3} parent=0
    _
  %s17 = ssub.s32 1, %s15
  %s18 = scalar_select 0, %s17, %s15
  $region1: #{bottleneck_forward.3} parent=0
    #allocation2 [shape = 'u8[65536]{0}', space=vmem, size = 0x10000, scoped, tag = 'output window, operand 0']
    #allocation3 [shape = 's32[2]{0}', space=sflag, size = 0x8, scoped, tag = 'scoped memory for bottleneck_forward.3']
    %19 = vsyncpa [#allocation3], 0
    %s20 = scalar_lea.sflag [#allocation3], 1
    %21 = vsyncpa %s20, 0
    loop: start=0, step=1, limit=4
    $region2: #{bottleneck_forward.3} parent=1 // loop_pre_header
      _
    $region3: #{bottleneck_forward.3} parent=1 // loop_header
      %s23 = sphi 0, %s27
      %p24 = scmp.ge.s32.totalorder %s23, 4
      %s33 = sphi 0, %s35
      %s36 = sphi 0, %s33
      %s37 = sphi 0, %s36
      %s53 = sphi 0, %s37
      %s59 = sphi 0, %s61
      %s62 = sphi 0, %s59
      %s63 = sphi 0, %s62
      %s79 = sphi 0, %s63
      %s85 = sphi 0, %s87
      %s88 = sphi 0, %s85
      %s89 = sphi 0, %s88
      %s105 = sphi 0, %s89
      %s111 = sphi 0, %s113
      %s114 = sphi 0, %s111
      %s115 = sphi 0, %s114
      %s131 = sphi 0, %s115
      %s135 = sphi 0, %s135
      %s137 = sphi 0, %s135
      %s138 = sphi 0, %s137
      %s152 = sphi 0, %s138
      %s156 = sphi 0, %s156
      %s158 = sphi 0, %s156
      %s159 = sphi 0, %s158
      %s173 = sphi 0, %s159
      %s177 = sphi 0, %s177
      %s179 = sphi 0, %s177
      %s180 = sphi 0, %s179
      %s194 = sphi 0, %s180
      %s198 = sphi 0, %s198
      %s200 = sphi 0, %s198
      %s201 = sphi 0, %s200
      %s215 = sphi 0, %s201
      %s219 = sphi 0, %s219
      %s221 = sphi 0, %s219
      %s222 = sphi 0, %s221
      %s236 = sphi 0, %s222
      %s240 = sphi 0, %s240
      %s242 = sphi 0, %s240
      %s243 = sphi 0, %s242
      %s257 = sphi 0, %s243
      %s263 = sphi 0, %s265
      %s266 = sphi 0, %s263
      %s267 = sphi 0, %s266
      %s283 = sphi 0, %s267
      %s287 = sphi 0, %s287
      %s289 = sphi 0, %s287
      %s290 = sphi 0, %s289
      %s304 = sphi 0, %s290
      %s308 = sphi 0, %s308
      %s310 = sphi 0, %s308
      %s311 = sphi 0, %s310
      %s325 = sphi 0, %s311
      %s329 = sphi 0, %s329
      %s331 = sphi 0, %s329
      %s332 = sphi 0, %s331
      %s346 = sphi 0, %s332
      %s352 = sphi 0, %s354
      %s355 = sphi 0, %s352
      %s356 = sphi 0, %s355
      %s372 = sphi 0, %s356
    $region4: #{bottleneck_forward.3} parent=1 // loop_header_branch
      %26 = sbr.rel (%p24) target = $region8
    $region5: #{bottleneck_forward.3} parent=1 // loop_body
      %s28 = ssub.s32 %s23, 1
      %s29 = ssub.s32 %s23, 2
      %s30 = sadd.s32 %s23, 1
      %s31 = ssub.s32 %s23, %s30
      %p32 = scmp.eq.s32.totalorder %s31, 0
      %s34 = sadd.s32 %s33, 1
      %s35 = scalar_select %p32, %s33, %s34
      %p38 = pneg %p32
      %p39 = scmp.eq.s32.totalorder %s23, 1
      %p40 = por %p38, %p39
      %p41 = scmp.ne.s32.totalorder %s33, %s36
      %p42 = scmp.eq.s32.totalorder %s23, 0
      %p43 = por %p41, %p42
      %p44 = scmp.ne.s32.totalorder %s33, %s36
      %p45 = scmp.eq.s32.totalorder %s28, 1
      %p46 = por %p44, %p45
      %p47 = scmp.ne.s32.totalorder %s36, %s37
      %p48 = scmp.eq.s32.totalorder %s28, 0
      %p49 = por %p47, %p48
      %p50 = scmp.ne.s32.totalorder %s36, %s37
      %p51 = scmp.eq.s32.totalorder %s29, 1
      %p52 = por %p50, %p51
      %p54 = scmp.ne.s32.totalorder %s37, %s53
      %p55 = scmp.eq.s32.totalorder %s29, 0
      %p56 = por %p54, %p55
      %s57 = ssub.s32 %s23, %s30
      %p58 = scmp.eq.s32.totalorder %s57, 0
      %s60 = sadd.s32 %s59, 1
      %s61 = scalar_select %p58, %s59, %s60
      %p64 = pneg %p58
      %p65 = scmp.eq.s32.totalorder %s23, 1
      %p66 = por %p64, %p65
      %p67 = scmp.ne.s32.totalorder %s59, %s62
      %p68 = scmp.eq.s32.totalorder %s23, 0
      %p69 = por %p67, %p68
      %p70 = scmp.ne.s32.totalorder %s59, %s62
      %p71 = scmp.eq.s32.totalorder %s28, 1
      %p72 = por %p70, %p71
      %p73 = scmp.ne.s32.totalorder %s62, %s63
      %p74 = scmp.eq.s32.totalorder %s28, 0
      %p75 = por %p73, %p74
      %p76 = scmp.ne.s32.totalorder %s62, %s63
      %p77 = scmp.eq.s32.totalorder %s29, 1
      %p78 = por %p76, %p77
      %p80 = scmp.ne.s32.totalorder %s63, %s79
      %p81 = scmp.eq.s32.totalorder %s29, 0
      %p82 = por %p80, %p81
      %s83 = ssub.s32 %s23, %s30
      %p84 = scmp.eq.s32.totalorder %s83, 0
      %s86 = sadd.s32 %s85, 1
      %s87 = scalar_select %p84, %s85, %s86
      %p90 = pneg %p84
      %p91 = scmp.eq.s32.totalorder %s23, 1
      %p92 = por %p90, %p91
      %p93 = scmp.ne.s32.totalorder %s85, %s88
      %p94 = scmp.eq.s32.totalorder %s23, 0
      %p95 = por %p93, %p94
      %p96 = scmp.ne.s32.totalorder %s85, %s88
      %p97 = scmp.eq.s32.totalorder %s28, 1
      %p98 = por %p96, %p97
      %p99 = scmp.ne.s32.totalorder %s88, %s89
      %p100 = scmp.eq.s32.totalorder %s28, 0
      %p101 = por %p99, %p100
      %p102 = scmp.ne.s32.totalorder %s88, %s89
      %p103 = scmp.eq.s32.totalorder %s29, 1
      %p104 = por %p102, %p103
      %p106 = scmp.ne.s32.totalorder %s89, %s105
      %p107 = scmp.eq.s32.totalorder %s29, 0
      %p108 = por %p106, %p107
      %s109 = ssub.s32 %s23, %s30
      %p110 = scmp.eq.s32.totalorder %s109, 0
      %s112 = sadd.s32 %s111, 1
      %s113 = scalar_select %p110, %s111, %s112
      %p116 = pneg %p110
      %p117 = scmp.eq.s32.totalorder %s23, 1
      %p118 = por %p116, %p117
      %p119 = scmp.ne.s32.totalorder %s111, %s114
      %p120 = scmp.eq.s32.totalorder %s23, 0
      %p121 = por %p119, %p120
      %p122 = scmp.ne.s32.totalorder %s111, %s114
      %p123 = scmp.eq.s32.totalorder %s28, 1
      %p124 = por %p122, %p123
      %p125 = scmp.ne.s32.totalorder %s114, %s115
      %p126 = scmp.eq.s32.totalorder %s28, 0
      %p127 = por %p125, %p126
      %p128 = scmp.ne.s32.totalorder %s114, %s115
      %p129 = scmp.eq.s32.totalorder %s29, 1
      %p130 = por %p128, %p129
      %p132 = scmp.ne.s32.totalorder %s115, %s131
      %p133 = scmp.eq.s32.totalorder %s29, 0
      %p134 = por %p132, %p133
      %s136 = sadd.s32 %s135, 1
      %p139 = scmp.eq.s32.totalorder %s23, 1
      %p140 = scmp.ne.s32.totalorder %s135, %s137
      %p141 = scmp.eq.s32.totalorder %s23, 0
      %p142 = por %p140, %p141
      %p143 = scmp.ne.s32.totalorder %s135, %s137
      %p144 = scmp.eq.s32.totalorder %s28, 1
      %p145 = por %p143, %p144
      %p146 = scmp.ne.s32.totalorder %s137, %s138
      %p147 = scmp.eq.s32.totalorder %s28, 0
      %p148 = por %p146, %p147
      %p149 = scmp.ne.s32.totalorder %s137, %s138
      %p150 = scmp.eq.s32.totalorder %s29, 1
      %p151 = por %p149, %p150
      %p153 = scmp.ne.s32.totalorder %s138, %s152
      %p154 = scmp.eq.s32.totalorder %s29, 0
      %p155 = por %p153, %p154
      %s157 = sadd.s32 %s156, 1
      %p160 = scmp.eq.s32.totalorder %s23, 1
      %p161 = scmp.ne.s32.totalorder %s156, %s158
      %p162 = scmp.eq.s32.totalorder %s23, 0
      %p163 = por %p161, %p162
      %p164 = scmp.ne.s32.totalorder %s156, %s158
      %p165 = scmp.eq.s32.totalorder %s28, 1
      %p166 = por %p164, %p165
      %p167 = scmp.ne.s32.totalorder %s158, %s159
      %p168 = scmp.eq.s32.totalorder %s28, 0
      %p169 = por %p167, %p168
      %p170 = scmp.ne.s32.totalorder %s158, %s159
      %p171 = scmp.eq.s32.totalorder %s29, 1
      %p172 = por %p170, %p171
      %p174 = scmp.ne.s32.totalorder %s159, %s173
      %p175 = scmp.eq.s32.totalorder %s29, 0
      %p176 = por %p174, %p175
      %s178 = sadd.s32 %s177, 1
      %p181 = scmp.eq.s32.totalorder %s23, 1
      %p182 = scmp.ne.s32.totalorder %s177, %s179
      %p183 = scmp.eq.s32.totalorder %s23, 0
      %p184 = por %p182, %p183
      %p185 = scmp.ne.s32.totalorder %s177, %s179
      %p186 = scmp.eq.s32.totalorder %s28, 1
      %p187 = por %p185, %p186
      %p188 = scmp.ne.s32.totalorder %s179, %s180
      %p189 = scmp.eq.s32.totalorder %s28, 0
      %p190 = por %p188, %p189
      %p191 = scmp.ne.s32.totalorder %s179, %s180
      %p192 = scmp.eq.s32.totalorder %s29, 1
      %p193 = por %p191, %p192
      %p195 = scmp.ne.s32.totalorder %s180, %s194
      %p196 = scmp.eq.s32.totalorder %s29, 0
      %p197 = por %p195, %p196
      %s199 = sadd.s32 %s198, 1
      %p202 = scmp.eq.s32.totalorder %s23, 1
      %p203 = scmp.ne.s32.totalorder %s198, %s200
      %p204 = scmp.eq.s32.totalorder %s23, 0
      %p205 = por %p203, %p204
      %p206 = scmp.ne.s32.totalorder %s198, %s200
      %p207 = scmp.eq.s32.totalorder %s28, 1
      %p208 = por %p206, %p207
      %p209 = scmp.ne.s32.totalorder %s200, %s201
      %p210 = scmp.eq.s32.totalorder %s28, 0
      %p211 = por %p209, %p210
      %p212 = scmp.ne.s32.totalorder %s200, %s201
      %p213 = scmp.eq.s32.totalorder %s29, 1
      %p214 = por %p212, %p213
      %p216 = scmp.ne.s32.totalorder %s201, %s215
      %p217 = scmp.eq.s32.totalorder %s29, 0
      %p218 = por %p216, %p217
      %s220 = sadd.s32 %s219, 1
      %p223 = scmp.eq.s32.totalorder %s23, 1
      %p224 = scmp.ne.s32.totalorder %s219, %s221
      %p225 = scmp.eq.s32.totalorder %s23, 0
      %p226 = por %p224, %p225
      %p227 = scmp.ne.s32.totalorder %s219, %s221
      %p228 = scmp.eq.s32.totalorder %s28, 1
      %p229 = por %p227, %p228
      %p230 = scmp.ne.s32.totalorder %s221, %s222
      %p231 = scmp.eq.s32.totalorder %s28, 0
      %p232 = por %p230, %p231
      %p233 = scmp.ne.s32.totalorder %s221, %s222
      %p234 = scmp.eq.s32.totalorder %s29, 1
      %p235 = por %p233, %p234
      %p237 = scmp.ne.s32.totalorder %s222, %s236
      %p238 = scmp.eq.s32.totalorder %s29, 0
      %p239 = por %p237, %p238
      %s241 = sadd.s32 %s240, 1
      %p244 = scmp.eq.s32.totalorder %s23, 1
      %p245 = scmp.ne.s32.totalorder %s240, %s242
      %p246 = scmp.eq.s32.totalorder %s23, 0
      %p247 = por %p245, %p246
      %p248 = scmp.ne.s32.totalorder %s240, %s242
      %p249 = scmp.eq.s32.totalorder %s28, 1
      %p250 = por %p248, %p249
      %p251 = scmp.ne.s32.totalorder %s242, %s243
      %p252 = scmp.eq.s32.totalorder %s28, 0
      %p253 = por %p251, %p252
      %p254 = scmp.ne.s32.totalorder %s242, %s243
      %p255 = scmp.eq.s32.totalorder %s29, 1
      %p256 = por %p254, %p255
      %p258 = scmp.ne.s32.totalorder %s243, %s257
      %p259 = scmp.eq.s32.totalorder %s29, 0
      %p260 = por %p258, %p259
      %s261 = ssub.s32 %s23, %s30
      %p262 = scmp.eq.s32.totalorder %s261, 0
      %s264 = sadd.s32 %s263, 1
      %s265 = scalar_select %p262, %s263, %s264
      %p268 = pneg %p262
      %p269 = scmp.eq.s32.totalorder %s23, 1
      %p270 = por %p268, %p269
      %p271 = scmp.ne.s32.totalorder %s263, %s266
      %p272 = scmp.eq.s32.totalorder %s23, 0
      %p273 = por %p271, %p272
      %p274 = scmp.ne.s32.totalorder %s263, %s266
      %p275 = scmp.eq.s32.totalorder %s28, 1
      %p276 = por %p274, %p275
      %p277 = scmp.ne.s32.totalorder %s266, %s267
      %p278 = scmp.eq.s32.totalorder %s28, 0
      %p279 = por %p277, %p278
      %p280 = scmp.ne.s32.totalorder %s266, %s267
      %p281 = scmp.eq.s32.totalorder %s29, 1
      %p282 = por %p280, %p281
      %p284 = scmp.ne.s32.totalorder %s267, %s283
      %p285 = scmp.eq.s32.totalorder %s29, 0
      %p286 = por %p284, %p285
      %s288 = sadd.s32 %s287, 1
      %p291 = scmp.eq.s32.totalorder %s23, 1
      %p292 = scmp.ne.s32.totalorder %s287, %s289
      %p293 = scmp.eq.s32.totalorder %s23, 0
      %p294 = por %p292, %p293
      %p295 = scmp.ne.s32.totalorder %s287, %s289
      %p296 = scmp.eq.s32.totalorder %s28, 1
      %p297 = por %p295, %p296
      %p298 = scmp.ne.s32.totalorder %s289, %s290
      %p299 = scmp.eq.s32.totalorder %s28, 0
      %p300 = por %p298, %p299
      %p301 = scmp.ne.s32.totalorder %s289, %s290
      %p302 = scmp.eq.s32.totalorder %s29, 1
      %p303 = por %p301, %p302
      %p305 = scmp.ne.s32.totalorder %s290, %s304
      %p306 = scmp.eq.s32.totalorder %s29, 0
      %p307 = por %p305, %p306
      %s309 = sadd.s32 %s308, 1
      %p312 = scmp.eq.s32.totalorder %s23, 1
      %p313 = scmp.ne.s32.totalorder %s308, %s310
      %p314 = scmp.eq.s32.totalorder %s23, 0
      %p315 = por %p313, %p314
      %p316 = scmp.ne.s32.totalorder %s308, %s310
      %p317 = scmp.eq.s32.totalorder %s28, 1
      %p318 = por %p316, %p317
      %p319 = scmp.ne.s32.totalorder %s310, %s311
      %p320 = scmp.eq.s32.totalorder %s28, 0
      %p321 = por %p319, %p320
      %p322 = scmp.ne.s32.totalorder %s310, %s311
      %p323 = scmp.eq.s32.totalorder %s29, 1
      %p324 = por %p322, %p323
      %p326 = scmp.ne.s32.totalorder %s311, %s325
      %p327 = scmp.eq.s32.totalorder %s29, 0
      %p328 = por %p326, %p327
      %s330 = sadd.s32 %s329, 1
      %p333 = scmp.eq.s32.totalorder %s23, 1
      %p334 = scmp.ne.s32.totalorder %s329, %s331
      %p335 = scmp.eq.s32.totalorder %s23, 0
      %p336 = por %p334, %p335
      %p337 = scmp.ne.s32.totalorder %s329, %s331
      %p338 = scmp.eq.s32.totalorder %s28, 1
      %p339 = por %p337, %p338
      %p340 = scmp.ne.s32.totalorder %s331, %s332
      %p341 = scmp.eq.s32.totalorder %s28, 0
      %p342 = por %p340, %p341
      %p343 = scmp.ne.s32.totalorder %s331, %s332
      %p344 = scmp.eq.s32.totalorder %s29, 1
      %p345 = por %p343, %p344
      %p347 = scmp.ne.s32.totalorder %s332, %s346
      %p348 = scmp.eq.s32.totalorder %s29, 0
      %p349 = por %p347, %p348
      %s350 = ssub.s32 %s23, %s30
      %p351 = scmp.eq.s32.totalorder %s350, 0
      %s353 = sadd.s32 %s352, 1
      %s354 = scalar_select %p351, %s352, %s353
      %p357 = pneg %p351
      %p358 = scmp.eq.s32.totalorder %s23, 1
      %p359 = por %p357, %p358
      %p360 = scmp.ne.s32.totalorder %s352, %s355
      %p361 = scmp.eq.s32.totalorder %s23, 0
      %p362 = por %p360, %p361
      %p363 = scmp.ne.s32.totalorder %s352, %s355
      %p364 = scmp.eq.s32.totalorder %s28, 1
      %p365 = por %p363, %p364
      %p366 = scmp.ne.s32.totalorder %s355, %s356
      %p367 = scmp.eq.s32.totalorder %s28, 0
      %p368 = por %p366, %p367
      %p369 = scmp.ne.s32.totalorder %s355, %s356
      %p370 = scmp.eq.s32.totalorder %s29, 1
      %p371 = por %p369, %p370
      %p373 = scmp.ne.s32.totalorder %s356, %s372
      %p374 = scmp.eq.s32.totalorder %s29, 0
      %p375 = por %p373, %p374
      %p376 = scmp.le.s32.totalorder 1, %s23
      %p377 = scmp.lt.s32.totalorder %s23, 3
      %p378 = pnand %p376, %p377
      %p379 = pneg %p378
      // Predicated region
      $region9: #{bottleneck_forward.3} parent=5 // pred_check
        _
      $region10: #{bottleneck_forward.3} parent=5 // pred_check_branch
        %381 = sbr.rel (%p378) target = $region12
      $region11: #{bottleneck_forward.3} parent=5 // pred_region
        %s382 = ssub.s32 %s23, 1
        // Predicated region
        $region13: #{bottleneck_forward.3} parent=11 // pred_check
          %p383 = pneg %p148
        $region14: #{bottleneck_forward.3} parent=11 // pred_check_branch
          %385 = sbr.rel (%p383) target = $region16
        $region15: #{bottleneck_forward.3} parent=11 // pred_region
          _
        $region16: #{bottleneck_forward.3} parent=11 // pred_fallthru
          _
        // Predicated region
        $region17: #{bottleneck_forward.3} parent=11 // pred_check
          %p386 = pneg %p169
        $region18: #{bottleneck_forward.3} parent=11 // pred_check_branch
          %388 = sbr.rel (%p386) target = $region20
        $region19: #{bottleneck_forward.3} parent=11 // pred_region
          _
        $region20: #{bottleneck_forward.3} parent=11 // pred_fallthru
          _
        // Predicated region
        $region21: #{bottleneck_forward.3} parent=11 // pred_check
          %p389 = pneg %p190
        $region22: #{bottleneck_forward.3} parent=11 // pred_check_branch
          %391 = sbr.rel (%p389) target = $region24
        $region23: #{bottleneck_forward.3} parent=11 // pred_region
          _
        $region24: #{bottleneck_forward.3} parent=11 // pred_fallthru
          _
        // Predicated region
        $region25: #{bottleneck_forward.3} parent=11 // pred_check
          %p392 = pneg %p211
        $region26: #{bottleneck_forward.3} parent=11 // pred_check_branch
          %394 = sbr.rel (%p392) target = $region28
        $region27: #{bottleneck_forward.3} parent=11 // pred_region
          _
        $region28: #{bottleneck_forward.3} parent=11 // pred_fallthru
          _
        // Predicated region
        $region29: #{bottleneck_forward.3} parent=11 // pred_check
          %p395 = pneg %p232
        $region30: #{bottleneck_forward.3} parent=11 // pred_check_branch
          %397 = sbr.rel (%p395) target = $region32
        $region31: #{bottleneck_forward.3} parent=11 // pred_region
          _
        $region32: #{bottleneck_forward.3} parent=11 // pred_fallthru
          _
        // Predicated region
        $region33: #{bottleneck_forward.3} parent=11 // pred_check
          %p398 = pneg %p253
        $region34: #{bottleneck_forward.3} parent=11 // pred_check_branch
          %400 = sbr.rel (%p398) target = $region36
        $region35: #{bottleneck_forward.3} parent=11 // pred_region
          _
        $region36: #{bottleneck_forward.3} parent=11 // pred_fallthru
          _
        // Predicated region
        $region37: #{bottleneck_forward.3} parent=11 // pred_check
          %p401 = pneg %p300
        $region38: #{bottleneck_forward.3} parent=11 // pred_check_branch
          %403 = sbr.rel (%p401) target = $region40
        $region39: #{bottleneck_forward.3} parent=11 // pred_region
          _
        $region40: #{bottleneck_forward.3} parent=11 // pred_fallthru
          _
        // Predicated region
        $region41: #{bottleneck_forward.3} parent=11 // pred_check
          %p404 = pneg %p321
        $region42: #{bottleneck_forward.3} parent=11 // pred_check_branch
          %406 = sbr.rel (%p404) target = $region44
        $region43: #{bottleneck_forward.3} parent=11 // pred_region
          _
        $region44: #{bottleneck_forward.3} parent=11 // pred_fallthru
          _
        // Predicated region
        $region45: #{bottleneck_forward.3} parent=11 // pred_check
          %p407 = pneg %p342
        $region46: #{bottleneck_forward.3} parent=11 // pred_check_branch
          %409 = sbr.rel (%p407) target = $region48
        $region47: #{bottleneck_forward.3} parent=11 // pred_region
          _
        $region48: #{bottleneck_forward.3} parent=11 // pred_fallthru
          _
      $region12: #{bottleneck_forward.3} parent=5 // pred_fallthru
        _
      %p410 = scmp.lt.s32.totalorder %s23, 2
      // Predicated region
      $region49: #{bottleneck_forward.3} parent=5 // pred_check
        %p411 = pneg %p410
      $region50: #{bottleneck_forward.3} parent=5 // pred_check_branch
        %413 = sbr.rel (%p411) target = $region52
      $region51: #{bottleneck_forward.3} parent=5 // pred_region
        // Predicated region
        $region53: #{bottleneck_forward.3} parent=51 // pred_check
          %p414 = pneg %p43
        $region54: #{bottleneck_forward.3} parent=51 // pred_check_branch
          %416 = sbr.rel (%p414) target = $region56
        $region55: #{bottleneck_forward.3} parent=51 // pred_region
          %p417 = scmp.lt.s32.totalorder %s23, 1
          %s418 = scalar_select %p417, %s23, 1
          %s419 = smul.addr %s418, 18
          %s420 = smul.addr %s419, 8
          %s421 = scalar_lea.vmem %s0, %s420
        $region56: #{bottleneck_forward.3} parent=51 // pred_fallthru
          _
        // Predicated region
        $region57: #{bottleneck_forward.3} parent=51 // pred_check
          %p422 = pneg %p69
        $region58: #{bottleneck_forward.3} parent=51 // pred_check_branch
          %424 = sbr.rel (%p422) target = $region60
        $region59: #{bottleneck_forward.3} parent=51 // pred_region
          %p425 = scmp.lt.s32.totalorder %s23, 1
          %s426 = scalar_select %p425, %s23, 1
          %s427 = smul.addr %s426, 18
          %s428 = smul.addr %s427, 8
          %s429 = scalar_lea.vmem %s1, %s428
        $region60: #{bottleneck_forward.3} parent=51 // pred_fallthru
          _
        // Predicated region
        $region61: #{bottleneck_forward.3} parent=51 // pred_check
          %p430 = pneg %p95
        $region62: #{bottleneck_forward.3} parent=51 // pred_check_branch
          %432 = sbr.rel (%p430) target = $region64
        $region63: #{bottleneck_forward.3} parent=51 // pred_region
          %p433 = scmp.lt.s32.totalorder %s23, 1
          %s434 = scalar_select %p433, %s23, 1
          %s435 = smul.addr %s434, 18
          %s436 = smul.addr %s435, 8
          %s437 = scalar_lea.vmem %s2, %s436
        $region64: #{bottleneck_forward.3} parent=51 // pred_fallthru
          _
        // Predicated region
        $region65: #{bottleneck_forward.3} parent=51 // pred_check
          %p438 = pneg %p121
        $region66: #{bottleneck_forward.3} parent=51 // pred_check_branch
          %440 = sbr.rel (%p438) target = $region68
        $region67: #{bottleneck_forward.3} parent=51 // pred_region
          %p441 = scmp.lt.s32.totalorder %s23, 1
          %s442 = scalar_select %p441, %s23, 1
          %s443 = smul.addr %s442, 18
          %s444 = smul.addr %s443, 8
          %s445 = scalar_lea.vmem %s3, %s444
        $region68: #{bottleneck_forward.3} parent=51 // pred_fallthru
          _
        // Predicated region
        $region69: #{bottleneck_forward.3} parent=51 // pred_check
          %p446 = pneg %p273
        $region70: #{bottleneck_forward.3} parent=51 // pred_check_branch
          %448 = sbr.rel (%p446) target = $region72
        $region71: #{bottleneck_forward.3} parent=51 // pred_region
          %p449 = scmp.lt.s32.totalorder %s23, 1
          %s450 = scalar_select %p449, %s23, 1
          %s451 = smul.addr %s450, 8
          %s452 = smul.addr %s451, 4
          %s453 = scalar_lea.vmem %s10, %s452
        $region72: #{bottleneck_forward.3} parent=51 // pred_fallthru
          _
      $region52: #{bottleneck_forward.3} parent=5 // pred_fallthru
        _
      %p454 = scmp.le.s32.totalorder 1, %s23
      %p455 = scmp.lt.s32.totalorder %s23, 3
      %p456 = pnand %p454, %p455
      %p457 = pneg %p456
      // Predicated region
      $region73: #{bottleneck_forward.3} parent=5 // pred_check
        _
      $region74: #{bottleneck_forward.3} parent=5 // pred_check_branch
        %459 = sbr.rel (%p456) target = $region76
      $region75: #{bottleneck_forward.3} parent=5 // pred_region
        %s460 = ssub.s32 %s23, 1
        %p461 = scmp.lt.s32.totalorder %s28, 1
        %s462 = scalar_select %p461, %s28, 1
        %s463 = smul.addr %s462, 18
        %s464 = smul.addr %s463, 8
        %s465 = scalar_lea.vmem %s0, %s464
        %p466 = pneg %p49
        %p467 = pneg %p46
        %p468 = scmp.lt.s32.totalorder %s28, 1
        %s469 = scalar_select %p468, %s28, 1
        %s470 = smul.addr %s469, 18
        %s471 = smul.addr %s470, 8
        %s472 = scalar_lea.vmem %s1, %s471
        %p473 = pneg %p75
        %p474 = pneg %p72
        %p475 = scmp.lt.s32.totalorder %s28, 1
        %s476 = scalar_select %p475, %s28, 1
        %s477 = smul.addr %s476, 18
        %s478 = smul.addr %s477, 8
        %s479 = scalar_lea.vmem %s2, %s478
        %p480 = pneg %p101
        %p481 = pneg %p98
        %p482 = scmp.lt.s32.totalorder %s28, 1
        %s483 = scalar_select %p482, %s28, 1
        %s484 = smul.addr %s483, 18
        %s485 = smul.addr %s484, 8
        %s486 = scalar_lea.vmem %s3, %s485
        %p487 = pneg %p127
        %p488 = pneg %p124
        %p489 = pneg %p148
        %p490 = pneg %p145
        %p491 = pneg %p169
        %p492 = pneg %p166
        %p493 = pneg %p190
        %p494 = pneg %p187
        %p495 = pneg %p211
        %p496 = pneg %p208
        %p497 = pneg %p232
        %p498 = pneg %p229
        %p499 = pneg %p253
        %p500 = pneg %p250
        %p501 = scmp.lt.s32.totalorder %s28, 1
        %s502 = scalar_select %p501, %s28, 1
        %s503 = smul.addr %s502, 8
        %s504 = smul.addr %s503, 4
        %s505 = scalar_lea.vmem %s10, %s504
        %p506 = pneg %p279
        %p507 = pneg %p276
        %p508 = pneg %p300
        %p509 = pneg %p297
        %p510 = pneg %p321
        %p511 = pneg %p318
        %p512 = pneg %p342
        %p513 = pneg %p339
        %p514 = pneg %p368
        %p515 = pneg %p365
        %s516 = sand.u32 %s355, 1
        %s517 = scalar_lea.sflag [#allocation3], %s516
        %s518 = sand.u32 %s355, 1
        %s519 = smul.addr %s518, 64
        %s520 = scalar_lea.vmem [#allocation2], %s519
        %p521 = scmp.lt.s32.totalorder %s28, 1
        %s522 = scalar_select %p521, %s28, 1
        %s523 = smul.addr %s522, 18
        %s524 = smul.addr %s523, 8
        %s525 = scalar_lea.vmem %s0, %s524
        %p526 = scmp.lt.s32.totalorder %s28, 1
        %s527 = scalar_select %p526, %s28, 1
        %s528 = smul.addr %s527, 18
        %s529 = smul.addr %s528, 8
        %s530 = scalar_lea.vmem %s1, %s529
        %p531 = scmp.lt.s32.totalorder %s28, 1
        %s532 = scalar_select %p531, %s28, 1
        %s533 = smul.addr %s532, 18
        %s534 = smul.addr %s533, 8
        %s535 = scalar_lea.vmem %s2, %s534
        %p536 = scmp.lt.s32.totalorder %s28, 1
        %s537 = scalar_select %p536, %s28, 1
        %s538 = smul.addr %s537, 18
        %s539 = smul.addr %s538, 8
        %s540 = scalar_lea.vmem %s3, %s539
        %p541 = scmp.lt.s32.totalorder %s28, 1
        %s542 = scalar_select %p541, %s28, 1
        %s543 = smul.addr %s542, 8
        %s544 = smul.addr %s543, 4
        %s545 = scalar_lea.vmem %s10, %s544
        %v547 = vld [vmem:[%s525] sm:$0xff]
        %v548 = vld [vmem:[%s525 + $0x10] sm:$0xff]
        %v549 = vld [vmem:[%s525 + $0x20] sm:$0xff]
        %v550 = vld [vmem:[%s525 + $0x30] sm:$0xff]
        %v551 = vld [vmem:[%s525 + $0x40] sm:$0xff]
        %v552 = vld [vmem:[%s525 + $0x50] sm:$0xff]
        %v553 = vld [vmem:[%s525 + $0x60] sm:$0xff]
        %v554 = vld [vmem:[%s525 + $0x70] sm:$0xff]
        %v555 = vpack.c.bf16 %v547, %v547
        %v556 = vpack.c.bf16 %v548, %v548
        %v557 = vpack.c.bf16 %v549, %v549
        %v558 = vpack.c.bf16 %v550, %v550
        %v559 = vpack.c.bf16 %v551, %v551
        %v560 = vpack.c.bf16 %v552, %v552
        %v561 = vpack.c.bf16 %v553, %v553
        %v562 = vpack.c.bf16 %v554, %v554
        %v563 = vld [vmem:[%s4] sm:$0xf]
        %v564 = vld [vmem:[%s4 + $0x4] sm:$0xf]
        %v565 = vld [vmem:[%s4 + $0x8] sm:$0xf]
        %v566 = vld [vmem:[%s4 + $0xc] sm:$0xf]
        %v567 = vld [vmem:[%s4 + $0x10] sm:$0xf]
        %v568 = vld [vmem:[%s4 + $0x14] sm:$0xf]
        %v569 = vld [vmem:[%s4 + $0x18] sm:$0xf]
        %v570 = vld [vmem:[%s4 + $0x1c] sm:$0xf]
        %v571 = vld [vmem:[%s4 + $0x20] sm:$0xf]
        %v572 = vld [vmem:[%s4 + $0x24] sm:$0xf]
        %v573 = vld [vmem:[%s4 + $0x28] sm:$0xf]
        %v574 = vld [vmem:[%s4 + $0x2c] sm:$0xf]
        %v575 = vld [vmem:[%s4 + $0x30] sm:$0xf]
        %v576 = vld [vmem:[%s4 + $0x34] sm:$0xf]
        %v577 = vld [vmem:[%s4 + $0x38] sm:$0xf]
        %v578 = vld [vmem:[%s4 + $0x3c] sm:$0xf]
        %v579 = vld [vmem:[%s530] sm:$0xff]
        %v580 = vld [vmem:[%s530 + $0x10] sm:$0xff]
        %v581 = vld [vmem:[%s530 + $0x20] sm:$0xff]
        %v582 = vld [vmem:[%s530 + $0x30] sm:$0xff]
        %v583 = vld [vmem:[%s530 + $0x40] sm:$0xff]
        %v584 = vld [vmem:[%s530 + $0x50] sm:$0xff]
        %v585 = vld [vmem:[%s530 + $0x60] sm:$0xff]
        %v586 = vld [vmem:[%s530 + $0x70] sm:$0xff]
        %v587 = vpack.c.bf16 %v579, %v579
        %v588 = vpack.c.bf16 %v580, %v580
        %v589 = vpack.c.bf16 %v581, %v581
        %v590 = vpack.c.bf16 %v582, %v582
        %v591 = vpack.c.bf16 %v583, %v583
        %v592 = vpack.c.bf16 %v584, %v584
        %v593 = vpack.c.bf16 %v585, %v585
        %v594 = vpack.c.bf16 %v586, %v586
        %s595 = scalar_lea.vmem %s4, 64
        %v596 = vld [vmem:[%s595] sm:$0xf]
        %v597 = vld [vmem:[%s595 + $0x4] sm:$0xf]
        %v598 = vld [vmem:[%s595 + $0x8] sm:$0xf]
        %v599 = vld [vmem:[%s595 + $0xc] sm:$0xf]
        %v600 = vld [vmem:[%s595 + $0x10] sm:$0xf]
        %v601 = vld [vmem:[%s595 + $0x14] sm:$0xf]
        %v602 = vld [vmem:[%s595 + $0x18] sm:$0xf]
        %v603 = vld [vmem:[%s595 + $0x1c] sm:$0xf]
        %v604 = vld [vmem:[%s595 + $0x20] sm:$0xf]
        %v605 = vld [vmem:[%s595 + $0x24] sm:$0xf]
        %v606 = vld [vmem:[%s595 + $0x28] sm:$0xf]
        %v607 = vld [vmem:[%s595 + $0x2c] sm:$0xf]
        %v608 = vld [vmem:[%s595 + $0x30] sm:$0xf]
        %v609 = vld [vmem:[%s595 + $0x34] sm:$0xf]
        %v610 = vld [vmem:[%s595 + $0x38] sm:$0xf]
        %v611 = vld [vmem:[%s595 + $0x3c] sm:$0xf]
        %v620 = vunpack.c.l.b16 %v587
        %v621 = vunpack.c.l.b16 %v588
        %v622 = vunpack.c.l.b16 %v589
        %v623 = vunpack.c.l.b16 %v590
        %v624 = vunpack.c.l.b16 %v591
        %v625 = vunpack.c.l.b16 %v592
        %v626 = vunpack.c.l.b16 %v593
        %v627 = vunpack.c.l.b16 %v594
        %v628 = vpack.c.b16 %v621, %v620
        %v629 = vpack.c.b16 %v623, %v622
        %v630 = vpack.c.b16 %v625, %v624
        %v631 = vpack.c.b16 %v627, %v626
        %v652 = vunpack.c.l.b16 %v596
        %v653 = vunpack.c.l.b16 %v597
        %v654 = vunpack.c.l.b16 %v598
        %v655 = vunpack.c.l.b16 %v599
        %v656 = vunpack.c.l.b16 %v600
        %v657 = vunpack.c.l.b16 %v601
        %v658 = vunpack.c.l.b16 %v602
        %v659 = vunpack.c.l.b16 %v603
        %v660 = vunpack.c.l.b16 %v604
        %v661 = vunpack.c.l.b16 %v605
        %v662 = vunpack.c.l.b16 %v606
        %v663 = vunpack.c.l.b16 %v607
        %v664 = vunpack.c.l.b16 %v608
        %v665 = vunpack.c.l.b16 %v609
        %v666 = vunpack.c.l.b16 %v610
        %v667 = vunpack.c.l.b16 %v611
        %v668 = vpack.c.b16 %v653, %v652
        %v669 = vpack.c.b16 %v655, %v654
        %v670 = vpack.c.b16 %v657, %v656
        %v671 = vpack.c.b16 %v659, %v658
        %v672 = vpack.c.b16 %v661, %v660
        %v673 = vpack.c.b16 %v663, %v662
        %v674 = vpack.c.b16 %v665, %v664
        %v675 = vpack.c.b16 %v667, %v666
        %684 = vmatpush.bf16.msra.mxu0 %v675
        %685 = vmatpush.bf16.msra.mxu0 %v674
        %686 = vmatpush.bf16.msra.mxu0 %v673
        %687 = vmatpush.bf16.msra.mxu0 %v672
        %688 = vmatpush.bf16.msra.mxu0 %v671
        %689 = vmatpush.bf16.msra.mxu0 %v670
        %690 = vmatpush.bf16.msra.mxu0 %v669
        %691 = vmatpush.bf16.msra.mxu0 %v668
        %692 = vmatmul.bf16.gmra.mxu0 %v628
        %v693 = vpop.f32.mrf.mxu0
        %v694 = vadd.f32 0.0, %v693
        %v695 = vpop.f32.mrf.mxu0
        %v696 = vadd.f32 0.0, %v695
        %697 = vmatmul.bf16.gmra.mxu0 %v629
        %v698 = vpop.f32.mrf.mxu0
        %v699 = vadd.f32 0.0, %v698
        %v700 = vpop.f32.mrf.mxu0
        %v701 = vadd.f32 0.0, %v700
        %702 = vmatmul.bf16.gmra.mxu0 %v630
        %v703 = vpop.f32.mrf.mxu0
        %v704 = vadd.f32 0.0, %v703
        %v705 = vpop.f32.mrf.mxu0
        %v706 = vadd.f32 0.0, %v705
        %707 = vmatmul.bf16.gmra.mxu0 %v631
        %v708 = vpop.f32.mrf.mxu0
        %v709 = vadd.f32 0.0, %v708
        %v710 = vpop.f32.mrf.mxu0
        %v711 = vadd.f32 0.0, %v710
        %712 = vdwg.mxu0
        %v721 = vunpack.c.l.b16 %v555
        %v722 = vunpack.c.l.b16 %v556
        %v723 = vunpack.c.l.b16 %v557
        %v724 = vunpack.c.l.b16 %v558
        %v725 = vunpack.c.l.b16 %v559
        %v726 = vunpack.c.l.b16 %v560
        %v727 = vunpack.c.l.b16 %v561
        %v728 = vunpack.c.l.b16 %v562
        %v729 = vpack.c.b16 %v722, %v721
        %v730 = vpack.c.b16 %v724, %v723
        %v731 = vpack.c.b16 %v726, %v725
        %v732 = vpack.c.b16 %v728, %v727
        %v753 = vunpack.c.l.b16 %v563
        %v754 = vunpack.c.l.b16 %v564
        %v755 = vunpack.c.l.b16 %v565
        %v756 = vunpack.c.l.b16 %v566
        %v757 = vunpack.c.l.b16 %v567
        %v758 = vunpack.c.l.b16 %v568
        %v759 = vunpack.c.l.b16 %v569
        %v760 = vunpack.c.l.b16 %v570
        %v761 = vunpack.c.l.b16 %v571
        %v762 = vunpack.c.l.b16 %v572
        %v763 = vunpack.c.l.b16 %v573
        %v764 = vunpack.c.l.b16 %v574
        %v765 = vunpack.c.l.b16 %v575
        %v766 = vunpack.c.l.b16 %v576
        %v767 = vunpack.c.l.b16 %v577
        %v768 = vunpack.c.l.b16 %v578
        %v769 = vpack.c.b16 %v754, %v753
        %v770 = vpack.c.b16 %v756, %v755
        %v771 = vpack.c.b16 %v758, %v757
        %v772 = vpack.c.b16 %v760, %v759
        %v773 = vpack.c.b16 %v762, %v761
        %v774 = vpack.c.b16 %v764, %v763
        %v775 = vpack.c.b16 %v766, %v765
        %v776 = vpack.c.b16 %v768, %v767
        %785 = vmatpush.bf16.msra.mxu0 %v776
        %786 = vmatpush.bf16.msra.mxu0 %v775
        %787 = vmatpush.bf16.msra.mxu0 %v774
        %788 = vmatpush.bf16.msra.mxu0 %v773
        %789 = vmatpush.bf16.msra.mxu0 %v772
        %790 = vmatpush.bf16.msra.mxu0 %v771
        %791 = vmatpush.bf16.msra.mxu0 %v770
        %792 = vmatpush.bf16.msra.mxu0 %v769
        %793 = vmatmul.bf16.gmra.mxu0 %v729
        %v794 = vpop.f32.mrf.mxu0
        %v795 = vadd.f32 %v694, %v794
        %v796 = vpop.f32.mrf.mxu0
        %v797 = vadd.f32 %v696, %v796
        %798 = vmatmul.bf16.gmra.mxu0 %v730
        %v799 = vpop.f32.mrf.mxu0
        %v800 = vadd.f32 %v699, %v799
        %v801 = vpop.f32.mrf.mxu0
        %v802 = vadd.f32 %v701, %v801
        %803 = vmatmul.bf16.gmra.mxu0 %v731
        %v804 = vpop.f32.mrf.mxu0
        %v805 = vadd.f32 %v704, %v804
        %v806 = vpop.f32.mrf.mxu0
        %v807 = vadd.f32 %v706, %v806
        %808 = vmatmul.bf16.gmra.mxu0 %v732
        %v809 = vpop.f32.mrf.mxu0
        %v810 = vadd.f32 %v709, %v809
        %v811 = vpop.f32.mrf.mxu0
        %v812 = vadd.f32 %v711, %v811
        %813 = vdwg.mxu0
        %v814 = vld [vmem:[%s525 + $0x1] sm:$0xff]
        %v815 = vld [vmem:[%s525 + $0x11] sm:$0xff]
        %v816 = vld [vmem:[%s525 + $0x21] sm:$0xff]
        %v817 = vld [vmem:[%s525 + $0x31] sm:$0xff]
        %v818 = vld [vmem:[%s525 + $0x41] sm:$0xff]
        %v819 = vld [vmem:[%s525 + $0x51] sm:$0xff]
        %v820 = vld [vmem:[%s525 + $0x61] sm:$0xff]
        %v821 = vld [vmem:[%s525 + $0x71] sm:$0xff]
        %v822 = vpack.c.bf16 %v814, %v814
        %v823 = vpack.c.bf16 %v815, %v815
        %v824 = vpack.c.bf16 %v816, %v816
        %v825 = vpack.c.bf16 %v817, %v817
        %v826 = vpack.c.bf16 %v818, %v818
        %v827 = vpack.c.bf16 %v819, %v819
        %v828 = vpack.c.bf16 %v820, %v820
        %v829 = vpack.c.bf16 %v821, %v821
        %s830 = scalar_lea.vmem %s4, 128
        %v831 = vld [vmem:[%s830] sm:$0xf]
        %v832 = vld [vmem:[%s830 + $0x4] sm:$0xf]
        %v833 = vld [vmem:[%s830 + $0x8] sm:$0xf]
        %v834 = vld [vmem:[%s830 + $0xc] sm:$0xf]
        %v835 = vld [vmem:[%s830 + $0x10] sm:$0xf]
        %v836 = vld [vmem:[%s830 + $0x14] sm:$0xf]
        %v837 = vld [vmem:[%s830 + $0x18] sm:$0xf]
        %v838 = vld [vmem:[%s830 + $0x1c] sm:$0xf]
        %v839 = vld [vmem:[%s830 + $0x20] sm:$0xf]
        %v840 = vld [vmem:[%s830 + $0x24] sm:$0xf]
        %v841 = vld [vmem:[%s830 + $0x28] sm:$0xf]
        %v842 = vld [vmem:[%s830 + $0x2c] sm:$0xf]
        %v843 = vld [vmem:[%s830 + $0x30] sm:$0xf]
        %v844 = vld [vmem:[%s830 + $0x34] sm:$0xf]
        %v845 = vld [vmem:[%s830 + $0x38] sm:$0xf]
        %v846 = vld [vmem:[%s830 + $0x3c] sm:$0xf]
        %v855 = vunpack.c.l.b16 %v822
        %v856 = vunpack.c.l.b16 %v823
        %v857 = vunpack.c.l.b16 %v824
        %v858 = vunpack.c.l.b16 %v825
        %v859 = vunpack.c.l.b16 %v826
        %v860 = vunpack.c.l.b16 %v827
        %v861 = vunpack.c.l.b16 %v828
        %v862 = vunpack.c.l.b16 %v829
        %v863 = vpack.c.b16 %v856, %v855
        %v864 = vpack.c.b16 %v858, %v857
        %v865 = vpack.c.b16 %v860, %v859
        %v866 = vpack.c.b16 %v862, %v861
        %v887 = vunpack.c.l.b16 %v831
        %v888 = vunpack.c.l.b16 %v832
        %v889 = vunpack.c.l.b16 %v833
        %v890 = vunpack.c.l.b16 %v834
        %v891 = vunpack.c.l.b16 %v835
        %v892 = vunpack.c.l.b16 %v836
        %v893 = vunpack.c.l.b16 %v837
        %v894 = vunpack.c.l.b16 %v838
        %v895 = vunpack.c.l.b16 %v839
        %v896 = vunpack.c.l.b16 %v840
        %v897 = vunpack.c.l.b16 %v841
        %v898 = vunpack.c.l.b16 %v842
        %v899 = vunpack.c.l.b16 %v843
        %v900 = vunpack.c.l.b16 %v844
        %v901 = vunpack.c.l.b16 %v845
        %v902 = vunpack.c.l.b16 %v846
        %v903 = vpack.c.b16 %v888, %v887
        %v904 = vpack.c.b16 %v890, %v889
        %v905 = vpack.c.b16 %v892, %v891
        %v906 = vpack.c.b16 %v894, %v893
        %v907 = vpack.c.b16 %v896, %v895
        %v908 = vpack.c.b16 %v898, %v897
        %v909 = vpack.c.b16 %v900, %v899
        %v910 = vpack.c.b16 %v902, %v901
        %919 = vmatpush.bf16.msra.mxu0 %v910
        %920 = vmatpush.bf16.msra.mxu0 %v909
        %921 = vmatpush.bf16.msra.mxu0 %v908
        %922 = vmatpush.bf16.msra.mxu0 %v907
        %923 = vmatpush.bf16.msra.mxu0 %v906
        %924 = vmatpush.bf16.msra.mxu0 %v905
        %925 = vmatpush.bf16.msra.mxu0 %v904
        %926 = vmatpush.bf16.msra.mxu0 %v903
        %927 = vmatmul.bf16.gmra.mxu0 %v863
        %v928 = vpop.f32.mrf.mxu0
        %v929 = vadd.f32 0.0, %v928
        %v930 = vpop.f32.mrf.mxu0
        %v931 = vadd.f32 0.0, %v930
        %932 = vmatmul.bf16.gmra.mxu0 %v864
        %v933 = vpop.f32.mrf.mxu0
        %v934 = vadd.f32 0.0, %v933
        %v935 = vpop.f32.mrf.mxu0
        %v936 = vadd.f32 0.0, %v935
        %937 = vmatmul.bf16.gmra.mxu0 %v865
        %v938 = vpop.f32.mrf.mxu0
        %v939 = vadd.f32 0.0, %v938
        %v940 = vpop.f32.mrf.mxu0
        %v941 = vadd.f32 0.0, %v940
        %942 = vmatmul.bf16.gmra.mxu0 %v866
        %v943 = vpop.f32.mrf.mxu0
        %v944 = vadd.f32 0.0, %v943
        %v945 = vpop.f32.mrf.mxu0
        %v946 = vadd.f32 0.0, %v945
        %947 = vdwg.mxu0
        %v948 = vadd.f32 %v795, %v929
        %v949 = vadd.f32 %v797, %v931
        %v950 = vadd.f32 %v800, %v934
        %v951 = vadd.f32 %v802, %v936
        %v952 = vadd.f32 %v805, %v939
        %v953 = vadd.f32 %v807, %v941
        %v954 = vadd.f32 %v810, %v944
        %v955 = vadd.f32 %v812, %v946
        %v956 = vld [vmem:[%s535] sm:$0xff]
        %v957 = vld [vmem:[%s535 + $0x10] sm:$0xff]
        %v958 = vld [vmem:[%s535 + $0x20] sm:$0xff]
        %v959 = vld [vmem:[%s535 + $0x30] sm:$0xff]
        %v960 = vld [vmem:[%s535 + $0x40] sm:$0xff]
        %v961 = vld [vmem:[%s535 + $0x50] sm:$0xff]
        %v962 = vld [vmem:[%s535 + $0x60] sm:$0xff]
        %v963 = vld [vmem:[%s535 + $0x70] sm:$0xff]
        %v964 = vpack.c.bf16 %v956, %v956
        %v965 = vpack.c.bf16 %v957, %v957
        %v966 = vpack.c.bf16 %v958, %v958
        %v967 = vpack.c.bf16 %v959, %v959
        %v968 = vpack.c.bf16 %v960, %v960
        %v969 = vpack.c.bf16 %v961, %v961
        %v970 = vpack.c.bf16 %v962, %v962
        %v971 = vpack.c.bf16 %v963, %v963
        %s972 = scalar_lea.vmem %s4, 192
        %v973 = vld [vmem:[%s972] sm:$0xf]
        %v974 = vld [vmem:[%s972 + $0x4] sm:$0xf]
        %v975 = vld [vmem:[%s972 + $0x8] sm:$0xf]
        %v976 = vld [vmem:[%s972 + $0xc] sm:$0xf]
        %v977 = vld [vmem:[%s972 + $0x10] sm:$0xf]
        %v978 = vld [vmem:[%s972 + $0x14] sm:$0xf]
        %v979 = vld [vmem:[%s972 + $0x18] sm:$0xf]
        %v980 = vld [vmem:[%s972 + $0x1c] sm:$0xf]
        %v981 = vld [vmem:[%s972 + $0x20] sm:$0xf]
        %v982 = vld [vmem:[%s972 + $0x24] sm:$0xf]
        %v983 = vld [vmem:[%s972 + $0x28] sm:$0xf]
        %v984 = vld [vmem:[%s972 + $0x2c] sm:$0xf]
        %v985 = vld [vmem:[%s972 + $0x30] sm:$0xf]
        %v986 = vld [vmem:[%s972 + $0x34] sm:$0xf]
        %v987 = vld [vmem:[%s972 + $0x38] sm:$0xf]
        %v988 = vld [vmem:[%s972 + $0x3c] sm:$0xf]
        %v997 = vunpack.c.l.b16 %v964
        %v998 = vunpack.c.l.b16 %v965
        %v999 = vunpack.c.l.b16 %v966
        %v1000 = vunpack.c.l.b16 %v967
        %v1001 = vunpack.c.l.b16 %v968
        %v1002 = vunpack.c.l.b16 %v969
        %v1003 = vunpack.c.l.b16 %v970
        %v1004 = vunpack.c.l.b16 %v971
        %v1005 = vpack.c.b16 %v998, %v997
        %v1006 = vpack.c.b16 %v1000, %v999
        %v1007 = vpack.c.b16 %v1002, %v1001
        %v1008 = vpack.c.b16 %v1004, %v1003
        %v1029 = vunpack.c.l.b16 %v973
        %v1030 = vunpack.c.l.b16 %v974
        %v1031 = vunpack.c.l.b16 %v975
        %v1032 = vunpack.c.l.b16 %v976
        %v1033 = vunpack.c.l.b16 %v977
        %v1034 = vunpack.c.l.b16 %v978
        %v1035 = vunpack.c.l.b16 %v979
        %v1036 = vunpack.c.l.b16 %v980
        %v1037 = vunpack.c.l.b16 %v981
        %v1038 = vunpack.c.l.b16 %v982
        %v1039 = vunpack.c.l.b16 %v983
        %v1040 = vunpack.c.l.b16 %v984
        %v1041 = vunpack.c.l.b16 %v985
        %v1042 = vunpack.c.l.b16 %v986
        %v1043 = vunpack.c.l.b16 %v987
        %v1044 = vunpack.c.l.b16 %v988
        %v1045 = vpack.c.b16 %v1030, %v1029
        %v1046 = vpack.c.b16 %v1032, %v1031
        %v1047 = vpack.c.b16 %v1034, %v1033
        %v1048 = vpack.c.b16 %v1036, %v1035
        %v1049 = vpack.c.b16 %v1038, %v1037
        %v1050 = vpack.c.b16 %v1040, %v1039
        %v1051 = vpack.c.b16 %v1042, %v1041
        %v1052 = vpack.c.b16 %v1044, %v1043
        %1061 = vmatpush.bf16.msra.mxu0 %v1052
        %1062 = vmatpush.bf16.msra.mxu0 %v1051
        %1063 = vmatpush.bf16.msra.mxu0 %v1050
        %1064 = vmatpush.bf16.msra.mxu0 %v1049
        %1065 = vmatpush.bf16.msra.mxu0 %v1048
        %1066 = vmatpush.bf16.msra.mxu0 %v1047
        %1067 = vmatpush.bf16.msra.mxu0 %v1046
        %1068 = vmatpush.bf16.msra.mxu0 %v1045
        %1069 = vmatmul.bf16.gmra.mxu0 %v1005
        %v1070 = vpop.f32.mrf.mxu0
        %v1071 = vadd.f32 0.0, %v1070
        %v1072 = vpop.f32.mrf.mxu0
        %v1073 = vadd.f32 0.0, %v1072
        %1074 = vmatmul.bf16.gmra.mxu0 %v1006
        %v1075 = vpop.f32.mrf.mxu0
        %v1076 = vadd.f32 0.0, %v1075
        %v1077 = vpop.f32.mrf.mxu0
        %v1078 = vadd.f32 0.0, %v1077
        %1079 = vmatmul.bf16.gmra.mxu0 %v1007
        %v1080 = vpop.f32.mrf.mxu0
        %v1081 = vadd.f32 0.0, %v1080
        %v1082 = vpop.f32.mrf.mxu0
        %v1083 = vadd.f32 0.0, %v1082
        %1084 = vmatmul.bf16.gmra.mxu0 %v1008
        %v1085 = vpop.f32.mrf.mxu0
        %v1086 = vadd.f32 0.0, %v1085
        %v1087 = vpop.f32.mrf.mxu0
        %v1088 = vadd.f32 0.0, %v1087
        %1089 = vdwg.mxu0
        %v1090 = vadd.f32 %v948, %v1071
        %v1091 = vadd.f32 %v949, %v1073
        %v1092 = vadd.f32 %v950, %v1076
        %v1093 = vadd.f32 %v951, %v1078
        %v1094 = vadd.f32 %v952, %v1081
        %v1095 = vadd.f32 %v953, %v1083
        %v1096 = vadd.f32 %v954, %v1086
        %v1097 = vadd.f32 %v955, %v1088
        %v1098 = vld [vmem:[%s540] sm:$0xff]
        %v1099 = vld [vmem:[%s540 + $0x10] sm:$0xff]
        %v1100 = vld [vmem:[%s540 + $0x20] sm:$0xff]
        %v1101 = vld [vmem:[%s540 + $0x30] sm:$0xff]
        %v1102 = vld [vmem:[%s540 + $0x40] sm:$0xff]
        %v1103 = vld [vmem:[%s540 + $0x50] sm:$0xff]
        %v1104 = vld [vmem:[%s540 + $0x60] sm:$0xff]
        %v1105 = vld [vmem:[%s540 + $0x70] sm:$0xff]
        %v1106 = vpack.c.bf16 %v1098, %v1098
        %v1107 = vpack.c.bf16 %v1099, %v1099
        %v1108 = vpack.c.bf16 %v1100, %v1100
        %v1109 = vpack.c.bf16 %v1101, %v1101
        %v1110 = vpack.c.bf16 %v1102, %v1102
        %v1111 = vpack.c.bf16 %v1103, %v1103
        %v1112 = vpack.c.bf16 %v1104, %v1104
        %v1113 = vpack.c.bf16 %v1105, %v1105
        %s1114 = scalar_lea.vmem %s4, 256
        %v1115 = vld [vmem:[%s1114] sm:$0xf]
        %v1116 = vld [vmem:[%s1114 + $0x4] sm:$0xf]
        %v1117 = vld [vmem:[%s1114 + $0x8] sm:$0xf]
        %v1118 = vld [vmem:[%s1114 + $0xc] sm:$0xf]
        %v1119 = vld [vmem:[%s1114 + $0x10] sm:$0xf]
        %v1120 = vld [vmem:[%s1114 + $0x14] sm:$0xf]
        %v1121 = vld [vmem:[%s1114 + $0x18] sm:$0xf]
        %v1122 = vld [vmem:[%s1114 + $0x1c] sm:$0xf]
        %v1123 = vld [vmem:[%s1114 + $0x20] sm:$0xf]
        %v1124 = vld [vmem:[%s1114 + $0x24] sm:$0xf]
        %v1125 = vld [vmem:[%s1114 + $0x28] sm:$0xf]
        %v1126 = vld [vmem:[%s1114 + $0x2c] sm:$0xf]
        %v1127 = vld [vmem:[%s1114 + $0x30] sm:$0xf]
        %v1128 = vld [vmem:[%s1114 + $0x34] sm:$0xf]
        %v1129 = vld [vmem:[%s1114 + $0x38] sm:$0xf]
        %v1130 = vld [vmem:[%s1114 + $0x3c] sm:$0xf]
        %v1139 = vunpack.c.l.b16 %v1106
        %v1140 = vunpack.c.l.b16 %v1107
        %v1141 = vunpack.c.l.b16 %v1108
        %v1142 = vunpack.c.l.b16 %v1109
        %v1143 = vunpack.c.l.b16 %v1110
        %v1144 = vunpack.c.l.b16 %v1111
        %v1145 = vunpack.c.l.b16 %v1112
        %v1146 = vunpack.c.l.b16 %v1113
        %v1147 = vpack.c.b16 %v1140, %v1139
        %v1148 = vpack.c.b16 %v1142, %v1141
        %v1149 = vpack.c.b16 %v1144, %v1143
        %v1150 = vpack.c.b16 %v1146, %v1145
        %v1171 = vunpack.c.l.b16 %v1115
        %v1172 = vunpack.c.l.b16 %v1116
        %v1173 = vunpack.c.l.b16 %v1117
        %v1174 = vunpack.c.l.b16 %v1118
        %v1175 = vunpack.c.l.b16 %v1119
        %v1176 = vunpack.c.l.b16 %v1120
        %v1177 = vunpack.c.l.b16 %v1121
        %v1178 = vunpack.c.l.b16 %v1122
        %v1179 = vunpack.c.l.b16 %v1123
        %v1180 = vunpack.c.l.b16 %v1124
        %v1181 = vunpack.c.l.b16 %v1125
        %v1182 = vunpack.c.l.b16 %v1126
        %v1183 = vunpack.c.l.b16 %v1127
        %v1184 = vunpack.c.l.b16 %v1128
        %v1185 = vunpack.c.l.b16 %v1129
        %v1186 = vunpack.c.l.b16 %v1130
        %v1187 = vpack.c.b16 %v1172, %v1171
        %v1188 = vpack.c.b16 %v1174, %v1173
        %v1189 = vpack.c.b16 %v1176, %v1175
        %v1190 = vpack.c.b16 %v1178, %v1177
        %v1191 = vpack.c.b16 %v1180, %v1179
        %v1192 = vpack.c.b16 %v1182, %v1181
        %v1193 = vpack.c.b16 %v1184, %v1183
        %v1194 = vpack.c.b16 %v1186, %v1185
        %1203 = vmatpush.bf16.msra.mxu0 %v1194
        %1204 = vmatpush.bf16.msra.mxu0 %v1193
        %1205 = vmatpush.bf16.msra.mxu0 %v1192
        %1206 = vmatpush.bf16.msra.mxu0 %v1191
        %1207 = vmatpush.bf16.msra.mxu0 %v1190
        %1208 = vmatpush.bf16.msra.mxu0 %v1189
        %1209 = vmatpush.bf16.msra.mxu0 %v1188
        %1210 = vmatpush.bf16.msra.mxu0 %v1187
        %1211 = vmatmul.bf16.gmra.mxu0 %v1147
        %v1212 = vpop.f32.mrf.mxu0
        %v1213 = vadd.f32 0.0, %v1212
        %v1214 = vpop.f32.mrf.mxu0
        %v1215 = vadd.f32 0.0, %v1214
        %1216 = vmatmul.bf16.gmra.mxu0 %v1148
        %v1217 = vpop.f32.mrf.mxu0
        %v1218 = vadd.f32 0.0, %v1217
        %v1219 = vpop.f32.mrf.mxu0
        %v1220 = vadd.f32 0.0, %v1219
        %1221 = vmatmul.bf16.gmra.mxu0 %v1149
        %v1222 = vpop.f32.mrf.mxu0
        %v1223 = vadd.f32 0.0, %v1222
        %v1224 = vpop.f32.mrf.mxu0
        %v1225 = vadd.f32 0.0, %v1224
        %1226 = vmatmul.bf16.gmra.mxu0 %v1150
        %v1227 = vpop.f32.mrf.mxu0
        %v1228 = vadd.f32 0.0, %v1227
        %v1229 = vpop.f32.mrf.mxu0
        %v1230 = vadd.f32 0.0, %v1229
        %1231 = vdwg.mxu0
        %v1232 = vadd.f32 %v1090, %v1213
        %v1233 = vadd.f32 %v1091, %v1215
        %v1234 = vadd.f32 %v1092, %v1218
        %v1235 = vadd.f32 %v1093, %v1220
        %v1236 = vadd.f32 %v1094, %v1223
        %v1237 = vadd.f32 %v1095, %v1225
        %v1238 = vadd.f32 %v1096, %v1228
        %v1239 = vadd.f32 %v1097, %v1230
        %v1240 = vld [vmem:[%s535 + $0x1] sm:$0xff]
        %v1241 = vld [vmem:[%s535 + $0x11] sm:$0xff]
        %v1242 = vld [vmem:[%s535 + $0x21] sm:$0xff]
        %v1243 = vld [vmem:[%s535 + $0x31] sm:$0xff]
        %v1244 = vld [vmem:[%s535 + $0x41] sm:$0xff]
        %v1245 = vld [vmem:[%s535 + $0x51] sm:$0xff]
        %v1246 = vld [vmem:[%s535 + $0x61] sm:$0xff]
        %v1247 = vld [vmem:[%s535 + $0x71] sm:$0xff]
        %v1248 = vpack.c.bf16 %v1240, %v1240
        %v1249 = vpack.c.bf16 %v1241, %v1241
        %v1250 = vpack.c.bf16 %v1242, %v1242
        %v1251 = vpack.c.bf16 %v1243, %v1243
        %v1252 = vpack.c.bf16 %v1244, %v1244
        %v1253 = vpack.c.bf16 %v1245, %v1245
        %v1254 = vpack.c.bf16 %v1246, %v1246
        %v1255 = vpack.c.bf16 %v1247, %v1247
        %s1256 = scalar_lea.vmem %s4, 320
        %v1257 = vld [vmem:[%s1256] sm:$0xf]
        %v1258 = vld [vmem:[%s1256 + $0x4] sm:$0xf]
        %v1259 = vld [vmem:[%s1256 + $0x8] sm:$0xf]
        %v1260 = vld [vmem:[%s1256 + $0xc] sm:$0xf]
        %v1261 = vld [vmem:[%s1256 + $0x10] sm:$0xf]
        %v1262 = vld [vmem:[%s1256 + $0x14] sm:$0xf]
        %v1263 = vld [vmem:[%s1256 + $0x18] sm:$0xf]
        %v1264 = vld [vmem:[%s1256 + $0x1c] sm:$0xf]
        %v1265 = vld [vmem:[%s1256 + $0x20] sm:$0xf]
        %v1266 = vld [vmem:[%s1256 + $0x24] sm:$0xf]
        %v1267 = vld [vmem:[%s1256 + $0x28] sm:$0xf]
        %v1268 = vld [vmem:[%s1256 + $0x2c] sm:$0xf]
        %v1269 = vld [vmem:[%s1256 + $0x30] sm:$0xf]
        %v1270 = vld [vmem:[%s1256 + $0x34] sm:$0xf]
        %v1271 = vld [vmem:[%s1256 + $0x38] sm:$0xf]
        %v1272 = vld [vmem:[%s1256 + $0x3c] sm:$0xf]
        %v1281 = vunpack.c.l.b16 %v1248
        %v1282 = vunpack.c.l.b16 %v1249
        %v1283 = vunpack.c.l.b16 %v1250
        %v1284 = vunpack.c.l.b16 %v1251
        %v1285 = vunpack.c.l.b16 %v1252
        %v1286 = vunpack.c.l.b16 %v1253
        %v1287 = vunpack.c.l.b16 %v1254
        %v1288 = vunpack.c.l.b16 %v1255
        %v1289 = vpack.c.b16 %v1282, %v1281
        %v1290 = vpack.c.b16 %v1284, %v1283
        %v1291 = vpack.c.b16 %v1286, %v1285
        %v1292 = vpack.c.b16 %v1288, %v1287
        %v1313 = vunpack.c.l.b16 %v1257
        %v1314 = vunpack.c.l.b16 %v1258
        %v1315 = vunpack.c.l.b16 %v1259
        %v1316 = vunpack.c.l.b16 %v1260
        %v1317 = vunpack.c.l.b16 %v1261
        %v1318 = vunpack.c.l.b16 %v1262
        %v1319 = vunpack.c.l.b16 %v1263
        %v1320 = vunpack.c.l.b16 %v1264
        %v1321 = vunpack.c.l.b16 %v1265
        %v1322 = vunpack.c.l.b16 %v1266
        %v1323 = vunpack.c.l.b16 %v1267
        %v1324 = vunpack.c.l.b16 %v1268
        %v1325 = vunpack.c.l.b16 %v1269
        %v1326 = vunpack.c.l.b16 %v1270
        %v1327 = vunpack.c.l.b16 %v1271
        %v1328 = vunpack.c.l.b16 %v1272
        %v1329 = vpack.c.b16 %v1314, %v1313
        %v1330 = vpack.c.b16 %v1316, %v1315
        %v1331 = vpack.c.b16 %v1318, %v1317
        %v1332 = vpack.c.b16 %v1320, %v1319
        %v1333 = vpack.c.b16 %v1322, %v1321
        %v1334 = vpack.c.b16 %v1324, %v1323
        %v1335 = vpack.c.b16 %v1326, %v1325
        %v1336 = vpack.c.b16 %v1328, %v1327
        %1345 = vmatpush.bf16.msra.mxu0 %v1336
        %1346 = vmatpush.bf16.msra.mxu0 %v1335
        %1347 = vmatpush.bf16.msra.mxu0 %v1334
        %1348 = vmatpush.bf16.msra.mxu0 %v1333
        %1349 = vmatpush.bf16.msra.mxu0 %v1332
        %1350 = vmatpush.bf16.msra.mxu0 %v1331
        %1351 = vmatpush.bf16.msra.mxu0 %v1330
        %1352 = vmatpush.bf16.msra.mxu0 %v1329
        %1353 = vmatmul.bf16.gmra.mxu0 %v1289
        %v1354 = vpop.f32.mrf.mxu0
        %v1355 = vadd.f32 0.0, %v1354
        %v1356 = vpop.f32.mrf.mxu0
        %v1357 = vadd.f32 0.0, %v1356
        %1358 = vmatmul.bf16.gmra.mxu0 %v1290
        %v1359 = vpop.f32.mrf.mxu0
        %v1360 = vadd.f32 0.0, %v1359
        %v1361 = vpop.f32.mrf.mxu0
        %v1362 = vadd.f32 0.0, %v1361
        %1363 = vmatmul.bf16.gmra.mxu0 %v1291
        %v1364 = vpop.f32.mrf.mxu0
        %v1365 = vadd.f32 0.0, %v1364
        %v1366 = vpop.f32.mrf.mxu0
        %v1367 = vadd.f32 0.0, %v1366
        %1368 = vmatmul.bf16.gmra.mxu0 %v1292
        %v1369 = vpop.f32.mrf.mxu0
        %v1370 = vadd.f32 0.0, %v1369
        %v1371 = vpop.f32.mrf.mxu0
        %v1372 = vadd.f32 0.0, %v1371
        %1373 = vdwg.mxu0
        %v1374 = vadd.f32 %v1232, %v1355
        %v1375 = vadd.f32 %v1233, %v1357
        %v1376 = vadd.f32 %v1234, %v1360
        %v1377 = vadd.f32 %v1235, %v1362
        %v1378 = vadd.f32 %v1236, %v1365
        %v1379 = vadd.f32 %v1237, %v1367
        %v1380 = vadd.f32 %v1238, %v1370
        %v1381 = vadd.f32 %v1239, %v1372
        %s1382 = scalar_lea.vmem %s525, 16
        %v1383 = vld [vmem:[%s1382] sm:$0xff]
        %v1384 = vld [vmem:[%s1382 + $0x10] sm:$0xff]
        %v1385 = vld [vmem:[%s1382 + $0x20] sm:$0xff]
        %v1386 = vld [vmem:[%s1382 + $0x30] sm:$0xff]
        %v1387 = vld [vmem:[%s1382 + $0x40] sm:$0xff]
        %v1388 = vld [vmem:[%s1382 + $0x50] sm:$0xff]
        %v1389 = vld [vmem:[%s1382 + $0x60] sm:$0xff]
        %v1390 = vld [vmem:[%s1382 + $0x70] sm:$0xff]
        %v1391 = vpack.c.bf16 %v1383, %v1383
        %v1392 = vpack.c.bf16 %v1384, %v1384
        %v1393 = vpack.c.bf16 %v1385, %v1385
        %v1394 = vpack.c.bf16 %v1386, %v1386
        %v1395 = vpack.c.bf16 %v1387, %v1387
        %v1396 = vpack.c.bf16 %v1388, %v1388
        %v1397 = vpack.c.bf16 %v1389, %v1389
        %v1398 = vpack.c.bf16 %v1390, %v1390
        %s1399 = scalar_lea.vmem %s4, 384
        %v1400 = vld [vmem:[%s1399] sm:$0xf]
        %v1401 = vld [vmem:[%s1399 + $0x4] sm:$0xf]
        %v1402 = vld [vmem:[%s1399 + $0x8] sm:$0xf]
        %v1403 = vld [vmem:[%s1399 + $0xc] sm:$0xf]
        %v1404 = vld [vmem:[%s1399 + $0x10] sm:$0xf]
        %v1405 = vld [vmem:[%s1399 + $0x14] sm:$0xf]
        %v1406 = vld [vmem:[%s1399 + $0x18] sm:$0xf]
        %v1407 = vld [vmem:[%s1399 + $0x1c] sm:$0xf]
        %v1408 = vld [vmem:[%s1399 + $0x20] sm:$0xf]
        %v1409 = vld [vmem:[%s1399 + $0x24] sm:$0xf]
        %v1410 = vld [vmem:[%s1399 + $0x28] sm:$0xf]
        %v1411 = vld [vmem:[%s1399 + $0x2c] sm:$0xf]
        %v1412 = vld [vmem:[%s1399 + $0x30] sm:$0xf]
        %v1413 = vld [vmem:[%s1399 + $0x34] sm:$0xf]
        %v1414 = vld [vmem:[%s1399 + $0x38] sm:$0xf]
        %v1415 = vld [vmem:[%s1399 + $0x3c] sm:$0xf]
        %v1424 = vunpack.c.l.b16 %v1391
        %v1425 = vunpack.c.l.b16 %v1392
        %v1426 = vunpack.c.l.b16 %v1393
        %v1427 = vunpack.c.l.b16 %v1394
        %v1428 = vunpack.c.l.b16 %v1395
        %v1429 = vunpack.c.l.b16 %v1396
        %v1430 = vunpack.c.l.b16 %v1397
        %v1431 = vunpack.c.l.b16 %v1398
        %v1432 = vpack.c.b16 %v1425, %v1424
        %v1433 = vpack.c.b16 %v1427, %v1426
        %v1434 = vpack.c.b16 %v1429, %v1428
        %v1435 = vpack.c.b16 %v1431, %v1430
        %v1456 = vunpack.c.l.b16 %v1400
        %v1457 = vunpack.c.l.b16 %v1401
        %v1458 = vunpack.c.l.b16 %v1402
        %v1459 = vunpack.c.l.b16 %v1403
        %v1460 = vunpack.c.l.b16 %v1404
        %v1461 = vunpack.c.l.b16 %v1405
        %v1462 = vunpack.c.l.b16 %v1406
        %v1463 = vunpack.c.l.b16 %v1407
        %v1464 = vunpack.c.l.b16 %v1408
        %v1465 = vunpack.c.l.b16 %v1409
        %v1466 = vunpack.c.l.b16 %v1410
        %v1467 = vunpack.c.l.b16 %v1411
        %v1468 = vunpack.c.l.b16 %v1412
        %v1469 = vunpack.c.l.b16 %v1413
        %v1470 = vunpack.c.l.b16 %v1414
        %v1471 = vunpack.c.l.b16 %v1415
        %v1472 = vpack.c.b16 %v1457, %v1456
        %v1473 = vpack.c.b16 %v1459, %v1458
        %v1474 = vpack.c.b16 %v1461, %v1460
        %v1475 = vpack.c.b16 %v1463, %v1462
        %v1476 = vpack.c.b16 %v1465, %v1464
        %v1477 = vpack.c.b16 %v1467, %v1466
        %v1478 = vpack.c.b16 %v1469, %v1468
        %v1479 = vpack.c.b16 %v1471, %v1470
        %1488 = vmatpush.bf16.msra.mxu0 %v1479
        %1489 = vmatpush.bf16.msra.mxu0 %v1478
        %1490 = vmatpush.bf16.msra.mxu0 %v1477
        %1491 = vmatpush.bf16.msra.mxu0 %v1476
        %1492 = vmatpush.bf16.msra.mxu0 %v1475
        %1493 = vmatpush.bf16.msra.mxu0 %v1474
        %1494 = vmatpush.bf16.msra.mxu0 %v1473
        %1495 = vmatpush.bf16.msra.mxu0 %v1472
        %1496 = vmatmul.bf16.gmra.mxu0 %v1432
        %v1497 = vpop.f32.mrf.mxu0
        %v1498 = vadd.f32 0.0, %v1497
        %v1499 = vpop.f32.mrf.mxu0
        %v1500 = vadd.f32 0.0, %v1499
        %1501 = vmatmul.bf16.gmra.mxu0 %v1433
        %v1502 = vpop.f32.mrf.mxu0
        %v1503 = vadd.f32 0.0, %v1502
        %v1504 = vpop.f32.mrf.mxu0
        %v1505 = vadd.f32 0.0, %v1504
        %1506 = vmatmul.bf16.gmra.mxu0 %v1434
        %v1507 = vpop.f32.mrf.mxu0
        %v1508 = vadd.f32 0.0, %v1507
        %v1509 = vpop.f32.mrf.mxu0
        %v1510 = vadd.f32 0.0, %v1509
        %1511 = vmatmul.bf16.gmra.mxu0 %v1435
        %v1512 = vpop.f32.mrf.mxu0
        %v1513 = vadd.f32 0.0, %v1512
        %v1514 = vpop.f32.mrf.mxu0
        %v1515 = vadd.f32 0.0, %v1514
        %1516 = vdwg.mxu0
        %v1517 = vadd.f32 %v1374, %v1498
        %v1518 = vadd.f32 %v1375, %v1500
        %v1519 = vadd.f32 %v1376, %v1503
        %v1520 = vadd.f32 %v1377, %v1505
        %v1521 = vadd.f32 %v1378, %v1508
        %v1522 = vadd.f32 %v1379, %v1510
        %v1523 = vadd.f32 %v1380, %v1513
        %v1524 = vadd.f32 %v1381, %v1515
        %s1525 = scalar_lea.vmem %s530, 16
        %v1526 = vld [vmem:[%s1525] sm:$0xff]
        %v1527 = vld [vmem:[%s1525 + $0x10] sm:$0xff]
        %v1528 = vld [vmem:[%s1525 + $0x20] sm:$0xff]
        %v1529 = vld [vmem:[%s1525 + $0x30] sm:$0xff]
        %v1530 = vld [vmem:[%s1525 + $0x40] sm:$0xff]
        %v1531 = vld [vmem:[%s1525 + $0x50] sm:$0xff]
        %v1532 = vld [vmem:[%s1525 + $0x60] sm:$0xff]
        %v1533 = vld [vmem:[%s1525 + $0x70] sm:$0xff]
        %v1534 = vpack.c.bf16 %v1526, %v1526
        %v1535 = vpack.c.bf16 %v1527, %v1527
        %v1536 = vpack.c.bf16 %v1528, %v1528
        %v1537 = vpack.c.bf16 %v1529, %v1529
        %v1538 = vpack.c.bf16 %v1530, %v1530
        %v1539 = vpack.c.bf16 %v1531, %v1531
        %v1540 = vpack.c.bf16 %v1532, %v1532
        %v1541 = vpack.c.bf16 %v1533, %v1533
        %s1542 = scalar_lea.vmem %s4, 448
        %v1543 = vld [vmem:[%s1542] sm:$0xf]
        %v1544 = vld [vmem:[%s1542 + $0x4] sm:$0xf]
        %v1545 = vld [vmem:[%s1542 + $0x8] sm:$0xf]
        %v1546 = vld [vmem:[%s1542 + $0xc] sm:$0xf]
        %v1547 = vld [vmem:[%s1542 + $0x10] sm:$0xf]
        %v1548 = vld [vmem:[%s1542 + $0x14] sm:$0xf]
        %v1549 = vld [vmem:[%s1542 + $0x18] sm:$0xf]
        %v1550 = vld [vmem:[%s1542 + $0x1c] sm:$0xf]
        %v1551 = vld [vmem:[%s1542 + $0x20] sm:$0xf]
        %v1552 = vld [vmem:[%s1542 + $0x24] sm:$0xf]
        %v1553 = vld [vmem:[%s1542 + $0x28] sm:$0xf]
        %v1554 = vld [vmem:[%s1542 + $0x2c] sm:$0xf]
        %v1555 = vld [vmem:[%s1542 + $0x30] sm:$0xf]
        %v1556 = vld [vmem:[%s1542 + $0x34] sm:$0xf]
        %v1557 = vld [vmem:[%s1542 + $0x38] sm:$0xf]
        %v1558 = vld [vmem:[%s1542 + $0x3c] sm:$0xf]
        %v1567 = vunpack.c.l.b16 %v1534
        %v1568 = vunpack.c.l.b16 %v1535
        %v1569 = vunpack.c.l.b16 %v1536
        %v1570 = vunpack.c.l.b16 %v1537
        %v1571 = vunpack.c.l.b16 %v1538
        %v1572 = vunpack.c.l.b16 %v1539
        %v1573 = vunpack.c.l.b16 %v1540
        %v1574 = vunpack.c.l.b16 %v1541
        %v1575 = vpack.c.b16 %v1568, %v1567
        %v1576 = vpack.c.b16 %v1570, %v1569
        %v1577 = vpack.c.b16 %v1572, %v1571
        %v1578 = vpack.c.b16 %v1574, %v1573
        %v1599 = vunpack.c.l.b16 %v1543
        %v1600 = vunpack.c.l.b16 %v1544
        %v1601 = vunpack.c.l.b16 %v1545
        %v1602 = vunpack.c.l.b16 %v1546
        %v1603 = vunpack.c.l.b16 %v1547
        %v1604 = vunpack.c.l.b16 %v1548
        %v1605 = vunpack.c.l.b16 %v1549
        %v1606 = vunpack.c.l.b16 %v1550
        %v1607 = vunpack.c.l.b16 %v1551
        %v1608 = vunpack.c.l.b16 %v1552
        %v1609 = vunpack.c.l.b16 %v1553
        %v1610 = vunpack.c.l.b16 %v1554
        %v1611 = vunpack.c.l.b16 %v1555
        %v1612 = vunpack.c.l.b16 %v1556
        %v1613 = vunpack.c.l.b16 %v1557
        %v1614 = vunpack.c.l.b16 %v1558
        %v1615 = vpack.c.b16 %v1600, %v1599
        %v1616 = vpack.c.b16 %v1602, %v1601
        %v1617 = vpack.c.b16 %v1604, %v1603
        %v1618 = vpack.c.b16 %v1606, %v1605
        %v1619 = vpack.c.b16 %v1608, %v1607
        %v1620 = vpack.c.b16 %v1610, %v1609
        %v1621 = vpack.c.b16 %v1612, %v1611
        %v1622 = vpack.c.b16 %v1614, %v1613
        %1631 = vmatpush.bf16.msra.mxu0 %v1622
        %1632 = vmatpush.bf16.msra.mxu0 %v1621
        %1633 = vmatpush.bf16.msra.mxu0 %v1620
        %1634 = vmatpush.bf16.msra.mxu0 %v1619
        %1635 = vmatpush.bf16.msra.mxu0 %v1618
        %1636 = vmatpush.bf16.msra.mxu0 %v1617
        %1637 = vmatpush.bf16.msra.mxu0 %v1616
        %1638 = vmatpush.bf16.msra.mxu0 %v1615
        %1639 = vmatmul.bf16.gmra.mxu0 %v1575
        %v1640 = vpop.f32.mrf.mxu0
        %v1641 = vadd.f32 0.0, %v1640
        %v1642 = vpop.f32.mrf.mxu0
        %v1643 = vadd.f32 0.0, %v1642
        %1644 = vmatmul.bf16.gmra.mxu0 %v1576
        %v1645 = vpop.f32.mrf.mxu0
        %v1646 = vadd.f32 0.0, %v1645
        %v1647 = vpop.f32.mrf.mxu0
        %v1648 = vadd.f32 0.0, %v1647
        %1649 = vmatmul.bf16.gmra.mxu0 %v1577
        %v1650 = vpop.f32.mrf.mxu0
        %v1651 = vadd.f32 0.0, %v1650
        %v1652 = vpop.f32.mrf.mxu0
        %v1653 = vadd.f32 0.0, %v1652
        %1654 = vmatmul.bf16.gmra.mxu0 %v1578
        %v1655 = vpop.f32.mrf.mxu0
        %v1656 = vadd.f32 0.0, %v1655
        %v1657 = vpop.f32.mrf.mxu0
        %v1658 = vadd.f32 0.0, %v1657
        %1659 = vdwg.mxu0
        %v1660 = vadd.f32 %v1517, %v1641
        %v1661 = vadd.f32 %v1518, %v1643
        %v1662 = vadd.f32 %v1519, %v1646
        %v1663 = vadd.f32 %v1520, %v1648
        %v1664 = vadd.f32 %v1521, %v1651
        %v1665 = vadd.f32 %v1522, %v1653
        %v1666 = vadd.f32 %v1523, %v1656
        %v1667 = vadd.f32 %v1524, %v1658
        %v1668 = vld [vmem:[%s1382 + $0x1] sm:$0xff]
        %v1669 = vld [vmem:[%s1382 + $0x11] sm:$0xff]
        %v1670 = vld [vmem:[%s1382 + $0x21] sm:$0xff]
        %v1671 = vld [vmem:[%s1382 + $0x31] sm:$0xff]
        %v1672 = vld [vmem:[%s1382 + $0x41] sm:$0xff]
        %v1673 = vld [vmem:[%s1382 + $0x51] sm:$0xff]
        %v1674 = vld [vmem:[%s1382 + $0x61] sm:$0xff]
        %v1675 = vld [vmem:[%s1382 + $0x71] sm:$0xff]
        %v1676 = vpack.c.bf16 %v1668, %v1668
        %v1677 = vpack.c.bf16 %v1669, %v1669
        %v1678 = vpack.c.bf16 %v1670, %v1670
        %v1679 = vpack.c.bf16 %v1671, %v1671
        %v1680 = vpack.c.bf16 %v1672, %v1672
        %v1681 = vpack.c.bf16 %v1673, %v1673
        %v1682 = vpack.c.bf16 %v1674, %v1674
        %v1683 = vpack.c.bf16 %v1675, %v1675
        %s1684 = scalar_lea.vmem %s4, 512
        %v1685 = vld [vmem:[%s1684] sm:$0xf]
        %v1686 = vld [vmem:[%s1684 + $0x4] sm:$0xf]
        %v1687 = vld [vmem:[%s1684 + $0x8] sm:$0xf]
        %v1688 = vld [vmem:[%s1684 + $0xc] sm:$0xf]
        %v1689 = vld [vmem:[%s1684 + $0x10] sm:$0xf]
        %v1690 = vld [vmem:[%s1684 + $0x14] sm:$0xf]
        %v1691 = vld [vmem:[%s1684 + $0x18] sm:$0xf]
        %v1692 = vld [vmem:[%s1684 + $0x1c] sm:$0xf]
        %v1693 = vld [vmem:[%s1684 + $0x20] sm:$0xf]
        %v1694 = vld [vmem:[%s1684 + $0x24] sm:$0xf]
        %v1695 = vld [vmem:[%s1684 + $0x28] sm:$0xf]
        %v1696 = vld [vmem:[%s1684 + $0x2c] sm:$0xf]
        %v1697 = vld [vmem:[%s1684 + $0x30] sm:$0xf]
        %v1698 = vld [vmem:[%s1684 + $0x34] sm:$0xf]
        %v1699 = vld [vmem:[%s1684 + $0x38] sm:$0xf]
        %v1700 = vld [vmem:[%s1684 + $0x3c] sm:$0xf]
        %v1709 = vunpack.c.l.b16 %v1676
        %v1710 = vunpack.c.l.b16 %v1677
        %v1711 = vunpack.c.l.b16 %v1678
        %v1712 = vunpack.c.l.b16 %v1679
        %v1713 = vunpack.c.l.b16 %v1680
        %v1714 = vunpack.c.l.b16 %v1681
        %v1715 = vunpack.c.l.b16 %v1682
        %v1716 = vunpack.c.l.b16 %v1683
        %v1717 = vpack.c.b16 %v1710, %v1709
        %v1718 = vpack.c.b16 %v1712, %v1711
        %v1719 = vpack.c.b16 %v1714, %v1713
        %v1720 = vpack.c.b16 %v1716, %v1715
        %v1741 = vunpack.c.l.b16 %v1685
        %v1742 = vunpack.c.l.b16 %v1686
        %v1743 = vunpack.c.l.b16 %v1687
        %v1744 = vunpack.c.l.b16 %v1688
        %v1745 = vunpack.c.l.b16 %v1689
        %v1746 = vunpack.c.l.b16 %v1690
        %v1747 = vunpack.c.l.b16 %v1691
        %v1748 = vunpack.c.l.b16 %v1692
        %v1749 = vunpack.c.l.b16 %v1693
        %v1750 = vunpack.c.l.b16 %v1694
        %v1751 = vunpack.c.l.b16 %v1695
        %v1752 = vunpack.c.l.b16 %v1696
        %v1753 = vunpack.c.l.b16 %v1697
        %v1754 = vunpack.c.l.b16 %v1698
        %v1755 = vunpack.c.l.b16 %v1699
        %v1756 = vunpack.c.l.b16 %v1700
        %v1757 = vpack.c.b16 %v1742, %v1741
        %v1758 = vpack.c.b16 %v1744, %v1743
        %v1759 = vpack.c.b16 %v1746, %v1745
        %v1760 = vpack.c.b16 %v1748, %v1747
        %v1761 = vpack.c.b16 %v1750, %v1749
        %v1762 = vpack.c.b16 %v1752, %v1751
        %v1763 = vpack.c.b16 %v1754, %v1753
        %v1764 = vpack.c.b16 %v1756, %v1755
        %1773 = vmatpush.bf16.msra.mxu0 %v1764
        %1774 = vmatpush.bf16.msra.mxu0 %v1763
        %1775 = vmatpush.bf16.msra.mxu0 %v1762
        %1776 = vmatpush.bf16.msra.mxu0 %v1761
        %1777 = vmatpush.bf16.msra.mxu0 %v1760
        %1778 = vmatpush.bf16.msra.mxu0 %v1759
        %1779 = vmatpush.bf16.msra.mxu0 %v1758
        %1780 = vmatpush.bf16.msra.mxu0 %v1757
        %1781 = vmatmul.bf16.gmra.mxu0 %v1717
        %v1782 = vpop.f32.mrf.mxu0
        %v1783 = vadd.f32 0.0, %v1782
        %v1784 = vpop.f32.mrf.mxu0
        %v1785 = vadd.f32 0.0, %v1784
        %1786 = vmatmul.bf16.gmra.mxu0 %v1718
        %v1787 = vpop.f32.mrf.mxu0
        %v1788 = vadd.f32 0.0, %v1787
        %v1789 = vpop.f32.mrf.mxu0
        %v1790 = vadd.f32 0.0, %v1789
        %1791 = vmatmul.bf16.gmra.mxu0 %v1719
        %v1792 = vpop.f32.mrf.mxu0
        %v1793 = vadd.f32 0.0, %v1792
        %v1794 = vpop.f32.mrf.mxu0
        %v1795 = vadd.f32 0.0, %v1794
        %1796 = vmatmul.bf16.gmra.mxu0 %v1720
        %v1797 = vpop.f32.mrf.mxu0
        %v1798 = vadd.f32 0.0, %v1797
        %v1799 = vpop.f32.mrf.mxu0
        %v1800 = vadd.f32 0.0, %v1799
        %1801 = vdwg.mxu0
        %v1802 = vadd.f32 %v1660, %v1783
        %v1803 = vadd.f32 %v1661, %v1785
        %v1804 = vadd.f32 %v1662, %v1788
        %v1805 = vadd.f32 %v1663, %v1790
        %v1806 = vadd.f32 %v1664, %v1793
        %v1807 = vadd.f32 %v1665, %v1795
        %v1808 = vadd.f32 %v1666, %v1798
        %v1809 = vadd.f32 %v1667, %v1800
        %v1810 = vld [vmem:[%s5] sm:$0x1]
        %v1812 = vperm.slane %v1810, 0
        %v1814 = vmul.f32 %v1802, %v1812
        %v1815 = vmul.f32 %v1803, %v1812
        %v1816 = vmul.f32 %v1804, %v1812
        %v1817 = vmul.f32 %v1805, %v1812
        %v1818 = vmul.f32 %v1806, %v1812
        %v1819 = vmul.f32 %v1807, %v1812
        %v1820 = vmul.f32 %v1808, %v1812
        %v1821 = vmul.f32 %v1809, %v1812
        %v1822 = vld [vmem:[%s6] sm:$0x1]
        %v1824 = vperm.slane %v1822, 0
        %v1826 = vadd.f32 %v1814, %v1824
        %v1827 = vadd.f32 %v1815, %v1824
        %v1828 = vadd.f32 %v1816, %v1824
        %v1829 = vadd.f32 %v1817, %v1824
        %v1830 = vadd.f32 %v1818, %v1824
        %v1831 = vadd.f32 %v1819, %v1824
        %v1832 = vadd.f32 %v1820, %v1824
        %v1833 = vadd.f32 %v1821, %v1824
        %v1834 = vmax.f32 %v1826, 0.0
        %v1835 = vmax.f32 %v1827, 0.0
        %v1836 = vmax.f32 %v1828, 0.0
        %v1837 = vmax.f32 %v1829, 0.0
        %v1838 = vmax.f32 %v1830, 0.0
        %v1839 = vmax.f32 %v1831, 0.0
        %v1840 = vmax.f32 %v1832, 0.0
        %v1841 = vmax.f32 %v1833, 0.0
        %v1842 = vpack.c.bf16 %v1835, %v1834
        %v1843 = vpack.c.bf16 %v1837, %v1836
        %v1844 = vpack.c.bf16 %v1839, %v1838
        %v1845 = vpack.c.bf16 %v1841, %v1840
        %v1846 = vld [vmem:[%s7] sm:$0xf]
        %v1847 = vld [vmem:[%s7 + $0x4] sm:$0xf]
        %v1848 = vld [vmem:[%s7 + $0x8] sm:$0xf]
        %v1849 = vld [vmem:[%s7 + $0xc] sm:$0xf]
        %v1850 = vld [vmem:[%s7 + $0x10] sm:$0xf]
        %v1851 = vld [vmem:[%s7 + $0x14] sm:$0xf]
        %v1852 = vld [vmem:[%s7 + $0x18] sm:$0xf]
        %v1853 = vld [vmem:[%s7 + $0x1c] sm:$0xf]
        %v1854 = vld [vmem:[%s7 + $0x20] sm:$0xf]
        %v1855 = vld [vmem:[%s7 + $0x24] sm:$0xf]
        %v1856 = vld [vmem:[%s7 + $0x28] sm:$0xf]
        %v1857 = vld [vmem:[%s7 + $0x2c] sm:$0xf]
        %v1858 = vld [vmem:[%s7 + $0x30] sm:$0xf]
        %v1859 = vld [vmem:[%s7 + $0x34] sm:$0xf]
        %v1860 = vld [vmem:[%s7 + $0x38] sm:$0xf]
        %v1861 = vld [vmem:[%s7 + $0x3c] sm:$0xf]
        %v1878 = vunpack.c.l.b16 %v1846
        %v1879 = vunpack.c.l.b16 %v1847
        %v1880 = vunpack.c.l.b16 %v1848
        %v1881 = vunpack.c.l.b16 %v1849
        %v1882 = vunpack.c.l.b16 %v1850
        %v1883 = vunpack.c.l.b16 %v1851
        %v1884 = vunpack.c.l.b16 %v1852
        %v1885 = vunpack.c.l.b16 %v1853
        %v1886 = vunpack.c.l.b16 %v1854
        %v1887 = vunpack.c.l.b16 %v1855
        %v1888 = vunpack.c.l.b16 %v1856
        %v1889 = vunpack.c.l.b16 %v1857
        %v1890 = vunpack.c.l.b16 %v1858
        %v1891 = vunpack.c.l.b16 %v1859
        %v1892 = vunpack.c.l.b16 %v1860
        %v1893 = vunpack.c.l.b16 %v1861
        %v1894 = vpack.c.b16 %v1879, %v1878
        %v1895 = vpack.c.b16 %v1881, %v1880
        %v1896 = vpack.c.b16 %v1883, %v1882
        %v1897 = vpack.c.b16 %v1885, %v1884
        %v1898 = vpack.c.b16 %v1887, %v1886
        %v1899 = vpack.c.b16 %v1889, %v1888
        %v1900 = vpack.c.b16 %v1891, %v1890
        %v1901 = vpack.c.b16 %v1893, %v1892
        %1910 = vmatpush.bf16.msra.mxu0 %v1901
        %1911 = vmatpush.bf16.msra.mxu0 %v1900
        %1912 = vmatpush.bf16.msra.mxu0 %v1899
        %1913 = vmatpush.bf16.msra.mxu0 %v1898
        %1914 = vmatpush.bf16.msra.mxu0 %v1897
        %1915 = vmatpush.bf16.msra.mxu0 %v1896
        %1916 = vmatpush.bf16.msra.mxu0 %v1895
        %1917 = vmatpush.bf16.msra.mxu0 %v1894
        %1918 = vmatmul.bf16.gmra.mxu0 %v1842
        %v1919 = vpop.f32.mrf.mxu0
        %v1920 = vadd.f32 0.0, %v1919
        %v1921 = vpop.f32.mrf.mxu0
        %v1922 = vadd.f32 0.0, %v1921
        %1923 = vmatmul.bf16.gmra.mxu0 %v1843
        %v1924 = vpop.f32.mrf.mxu0
        %v1925 = vadd.f32 0.0, %v1924
        %v1926 = vpop.f32.mrf.mxu0
        %v1927 = vadd.f32 0.0, %v1926
        %1928 = vmatmul.bf16.gmra.mxu0 %v1844
        %v1929 = vpop.f32.mrf.mxu0
        %v1930 = vadd.f32 0.0, %v1929
        %v1931 = vpop.f32.mrf.mxu0
        %v1932 = vadd.f32 0.0, %v1931
        %1933 = vmatmul.bf16.gmra.mxu0 %v1845
        %v1934 = vpop.f32.mrf.mxu0
        %v1935 = vadd.f32 0.0, %v1934
        %v1936 = vpop.f32.mrf.mxu0
        %v1937 = vadd.f32 0.0, %v1936
        %1938 = vdwg.mxu0
        %v1939 = vld [vmem:[%s8] sm:$0x1]
        %v1941 = vperm.slane %v1939, 0
        %v1943 = vmul.f32 %v1920, %v1941
        %v1944 = vmul.f32 %v1922, %v1941
        %v1945 = vmul.f32 %v1925, %v1941
        %v1946 = vmul.f32 %v1927, %v1941
        %v1947 = vmul.f32 %v1930, %v1941
        %v1948 = vmul.f32 %v1932, %v1941
        %v1949 = vmul.f32 %v1935, %v1941
        %v1950 = vmul.f32 %v1937, %v1941
        %v1951 = vld [vmem:[%s9] sm:$0x1]
        %v1953 = vperm.slane %v1951, 0
        %v1955 = vadd.f32 %v1943, %v1953
        %v1956 = vadd.f32 %v1944, %v1953
        %v1957 = vadd.f32 %v1945, %v1953
        %v1958 = vadd.f32 %v1946, %v1953
        %v1959 = vadd.f32 %v1947, %v1953
        %v1960 = vadd.f32 %v1948, %v1953
        %v1961 = vadd.f32 %v1949, %v1953
        %v1962 = vadd.f32 %v1950, %v1953
        %v1963 = vld [vmem:[%s545] sm:$0xf]
        %v1964 = vld [vmem:[%s545 + $0x4] sm:$0xf]
        %v1965 = vld [vmem:[%s545 + $0x8] sm:$0xf]
        %v1966 = vld [vmem:[%s545 + $0xc] sm:$0xf]
        %v1967 = vld [vmem:[%s545 + $0x10] sm:$0xf]
        %v1968 = vld [vmem:[%s545 + $0x14] sm:$0xf]
        %v1969 = vld [vmem:[%s545 + $0x18] sm:$0xf]
        %v1970 = vld [vmem:[%s545 + $0x1c] sm:$0xf]
        %v1971 = vld [vmem:[%s11] sm:$0xf]
        %v1972 = vld [vmem:[%s11 + $0x4] sm:$0xf]
        %v1973 = vld [vmem:[%s11 + $0x8] sm:$0xf]
        %v1974 = vld [vmem:[%s11 + $0xc] sm:$0xf]
        %v1975 = vld [vmem:[%s11 + $0x10] sm:$0xf]
        %v1976 = vld [vmem:[%s11 + $0x14] sm:$0xf]
        %v1977 = vld [vmem:[%s11 + $0x18] sm:$0xf]
        %v1978 = vld [vmem:[%s11 + $0x1c] sm:$0xf]
        %v1987 = vunpack.c.l.b16 %v1963
        %v1988 = vunpack.c.l.b16 %v1964
        %v1989 = vunpack.c.l.b16 %v1965
        %v1990 = vunpack.c.l.b16 %v1966
        %v1991 = vunpack.c.l.b16 %v1967
        %v1992 = vunpack.c.l.b16 %v1968
        %v1993 = vunpack.c.l.b16 %v1969
        %v1994 = vunpack.c.l.b16 %v1970
        %v1995 = vpack.c.b16 %v1988, %v1987
        %v1996 = vpack.c.b16 %v1990, %v1989
        %v1997 = vpack.c.b16 %v1992, %v1991
        %v1998 = vpack.c.b16 %v1994, %v1993
        %v2007 = vunpack.c.l.b16 %v1971
        %v2008 = vunpack.c.l.b16 %v1972
        %v2009 = vunpack.c.l.b16 %v1973
        %v2010 = vunpack.c.l.b16 %v1974
        %v2011 = vunpack.c.l.b16 %v1975
        %v2012 = vunpack.c.l.b16 %v1976
        %v2013 = vunpack.c.l.b16 %v1977
        %v2014 = vunpack.c.l.b16 %v1978
        %v2015 = vpack.c.b16 %v2008, %v2007
        %v2016 = vpack.c.b16 %v2010, %v2009
        %v2017 = vpack.c.b16 %v2012, %v2011
        %v2018 = vpack.c.b16 %v2014, %v2013
        %vm2023 = vcmask 523264
        %v2025 = vsel %vm2023, %v1995, 0
        %v2028 = vsel %vm2023, %v1996, 0
        %v2031 = vsel %vm2023, %v1997, 0
        %v2034 = vsel %vm2023, %v1998, 0
        %2036 = vmatpush.bf16.msra.mxu0 0
        %2037 = vmatpush.bf16.msra.mxu0 0
        %2038 = vmatpush.bf16.msra.mxu0 0
        %2039 = vmatpush.bf16.msra.mxu0 0
        %2040 = vmatpush.bf16.msra.mxu0 %v2018
        %2041 = vmatpush.bf16.msra.mxu0 %v2017
        %2042 = vmatpush.bf16.msra.mxu0 %v2016
        %2043 = vmatpush.bf16.msra.mxu0 %v2015
        %2044 = vmatmul.bf16.gmra.mxu0 %v2025
        %v2045 = vpop.f32.mrf.mxu0
        %v2046 = vadd.f32 0.0, %v2045
        %v2047 = vpop.f32.mrf.mxu0
        %v2048 = vadd.f32 0.0, %v2047
        %2049 = vmatmul.bf16.gmra.mxu0 %v2028
        %v2050 = vpop.f32.mrf.mxu0
        %v2051 = vadd.f32 0.0, %v2050
        %v2052 = vpop.f32.mrf.mxu0
        %v2053 = vadd.f32 0.0, %v2052
        %2054 = vmatmul.bf16.gmra.mxu0 %v2031
        %v2055 = vpop.f32.mrf.mxu0
        %v2056 = vadd.f32 0.0, %v2055
        %v2057 = vpop.f32.mrf.mxu0
        %v2058 = vadd.f32 0.0, %v2057
        %2059 = vmatmul.bf16.gmra.mxu0 %v2034
        %v2060 = vpop.f32.mrf.mxu0
        %v2061 = vadd.f32 0.0, %v2060
        %v2062 = vpop.f32.mrf.mxu0
        %v2063 = vadd.f32 0.0, %v2062
        %2064 = vdwg.mxu0
        %v2065 = vld [vmem:[%s12] sm:$0x1]
        %v2067 = vperm.slane %v2065, 0
        %v2069 = vmul.f32 %v2046, %v2067
        %v2070 = vmul.f32 %v2048, %v2067
        %v2071 = vmul.f32 %v2051, %v2067
        %v2072 = vmul.f32 %v2053, %v2067
        %v2073 = vmul.f32 %v2056, %v2067
        %v2074 = vmul.f32 %v2058, %v2067
        %v2075 = vmul.f32 %v2061, %v2067
        %v2076 = vmul.f32 %v2063, %v2067
        %v2077 = vld [vmem:[%s13] sm:$0x1]
        %v2079 = vperm.slane %v2077, 0
        %v2081 = vadd.f32 %v2069, %v2079
        %v2082 = vadd.f32 %v2070, %v2079
        %v2083 = vadd.f32 %v2071, %v2079
        %v2084 = vadd.f32 %v2072, %v2079
        %v2085 = vadd.f32 %v2073, %v2079
        %v2086 = vadd.f32 %v2074, %v2079
        %v2087 = vadd.f32 %v2075, %v2079
        %v2088 = vadd.f32 %v2076, %v2079
        %v2089 = vadd.f32 %v1955, %v2081
        %v2090 = vadd.f32 %v1956, %v2082
        %v2091 = vadd.f32 %v1957, %v2083
        %v2092 = vadd.f32 %v1958, %v2084
        %v2093 = vadd.f32 %v1959, %v2085
        %v2094 = vadd.f32 %v1960, %v2086
        %v2095 = vadd.f32 %v1961, %v2087
        %v2096 = vadd.f32 %v1962, %v2088
        %v2097 = vmax.f32 %v2089, 0.0
        %v2098 = vmax.f32 %v2090, 0.0
        %v2099 = vmax.f32 %v2091, 0.0
        %v2100 = vmax.f32 %v2092, 0.0
        %v2101 = vmax.f32 %v2093, 0.0
        %v2102 = vmax.f32 %v2094, 0.0
        %v2103 = vmax.f32 %v2095, 0.0
        %v2104 = vmax.f32 %v2096, 0.0
        %2105 = vst [vmem:[%s520] sm:$0xff] %v2097
        %2106 = vst [vmem:[%s520 + $0x8] sm:$0xff] %v2098
        %2107 = vst [vmem:[%s520 + $0x10] sm:$0xff] %v2099
        %2108 = vst [vmem:[%s520 + $0x18] sm:$0xff] %v2100
        %2109 = vst [vmem:[%s520 + $0x20] sm:$0xff] %v2101
        %2110 = vst [vmem:[%s520 + $0x28] sm:$0xff] %v2102
        %2111 = vst [vmem:[%s520 + $0x30] sm:$0xff] %v2103
        %2112 = vst [vmem:[%s520 + $0x38] sm:$0xff] %v2104
        %s2113 = sand.u32 %s355, 1
        %s2114 = scalar_lea.sflag [#allocation3], %s2113
        %s2115 = sand.u32 %s355, 1
        %s2116 = smul.addr %s2115, 64
        %s2117 = scalar_lea.vmem [#allocation2], %s2116
        // Predicated region
        $region77: #{bottleneck_forward.3} parent=75 // pred_check
          %p2118 = pneg %p365
        $region78: #{bottleneck_forward.3} parent=75 // pred_check_branch
          %2120 = sbr.rel (%p2118) target = $region80
        $region79: #{bottleneck_forward.3} parent=75 // pred_region
          %2122 = vsyncadd %s2114, 0
          %s2123 = smul.addr %s28, 8
          %s2124 = smul.addr %s2123, 8
          %s2125 = scalar_lea.hbm %s14, %s2124
          %s2126 = sshll.u32 %s2117, 4
          %s2127 = int_to_ptr.vmem [resolvable:$true] %s2126
          %s2128 = sshll.u32 %s2125, 4
          %s2129 = int_to_ptr.hbm [resolvable:$true] %s2128
          %2134 = dma.vmem_to_hbm [thread:$0]  %s2127, 1024, %s2129, %s2114, 128, 128, 8
        $region80: #{bottleneck_forward.3} parent=75 // pred_fallthru
          _
      $region76: #{bottleneck_forward.3} parent=5 // pred_fallthru
        _
      %p2135 = scmp.le.s32.totalorder 2, %s23
      // Predicated region
      $region81: #{bottleneck_forward.3} parent=5 // pred_check
        %p2136 = pneg %p2135
      $region82: #{bottleneck_forward.3} parent=5 // pred_check_branch
        %2138 = sbr.rel (%p2136) target = $region84
      $region83: #{bottleneck_forward.3} parent=5 // pred_region
        %s2139 = ssub.s32 %s23, 2
        // Predicated region
        $region85: #{bottleneck_forward.3} parent=83 // pred_check
          %p2140 = pneg %p371
        $region86: #{bottleneck_forward.3} parent=83 // pred_check_branch
          %2142 = sbr.rel (%p2140) target = $region88
        $region87: #{bottleneck_forward.3} parent=83 // pred_region
          %s2143 = sand.u32 %s356, 1
          %s2144 = scalar_lea.sflag [#allocation3], %s2143
          %s2145 = sand.u32 %s356, 1
          %s2146 = smul.addr %s2145, 64
          %s2147 = scalar_lea.vmem [#allocation2], %s2146
          %2149 = dma.done %s2144, 1024
        $region88: #{bottleneck_forward.3} parent=83 // pred_fallthru
          _
      $region84: #{bottleneck_forward.3} parent=5 // pred_fallthru
        _
    $region6: #{bottleneck_forward.3} parent=1 // loop_footer
      %s27 = sadd.s32 1, %s23
    $region7: #{bottleneck_forward.3} parent=1 // loop_footer_branch
      %22 = sbr.rel target = $region3
    $region8: #{bottleneck_forward.3} parent=1 // loop_exit
      _
    %2150 = vsyncpa [#allocation3], 1
    %s2151 = scalar_lea.sflag [#allocation3], 1
    %2152 = vsyncpa %s2151, 1

</llo_original>
